<compile_context>
chip_gen: v5e
topology: v5e:2x2
jax: 0.10.0
libtpu: 0.0.40
codegen_flags: <defaults>
</compile_context>

<pallas_src>
import functools

import jax
import jax.numpy as jnp
from jax.experimental import pallas as pl
from jax.experimental.pallas import tpu as pltpu


def cross_attention_kernel(x_ref, ctx_ref, wq_ref, wkv_ref, wo_ref,
                           b_ref, o_ref, *, heads, dim_head, scale, mxu_dtype):
    bt, n, dq = x_ref.shape
    _, m, dc = ctx_ref.shape
    inner = heads * dim_head

    # Fused q and (k|v) projections: lane-dense canonical (rows, K) @ (K, N) matmuls.
    x2 = x_ref[...].reshape(bt * n, dq).astype(mxu_dtype)
    c2 = ctx_ref[...].reshape(bt * m, dc).astype(mxu_dtype)

    q = jnp.dot(x2, wq_ref[...].astype(mxu_dtype),
                preferred_element_type=jnp.float32)              # (bt*n, inner) f32
    kv = jnp.dot(c2, wkv_ref[...].astype(mxu_dtype),
                 preferred_element_type=jnp.float32)             # (bt*m, 2*inner) f32

    # Fold the 1/sqrt(dim_head) scale into q once (same element count as scaling
    # the scores, but done on a single tile before the head loop).
    q = (q * scale).reshape(bt, n, inner)
    # Split K/V at a 128-lane-aligned boundary (inner is a multiple of 128 here).
    k = kv[:, :inner].reshape(bt, m, inner)
    v = kv[:, inner:].reshape(bt, m, inner)

    # Per-head attention batched over the bt batch rows.  The score / prob tiles
    # are (bt, n, m): full 128-lane MXU tiles at realistic n, m.
    head_outs = []
    for h in range(heads):                                       # static unroll
        lo = h * dim_head
        qh = q[:, :, lo:lo + dim_head].astype(mxu_dtype)         # (bt, n, d)
        kh = k[:, :, lo:lo + dim_head].astype(mxu_dtype)         # (bt, m, d)
        vh = v[:, :, lo:lo + dim_head].astype(mxu_dtype)         # (bt, m, d)

        s = jnp.einsum('bnd,bmd->bnm', qh, kh,
                       preferred_element_type=jnp.float32)       # (bt, n, m) f32
        s_max = jnp.max(s, axis=-1, keepdims=True)
        p = jnp.exp(s - s_max)                                   # un-normalized probs (f32)
        denom = jnp.sum(p, axis=-1, keepdims=True)               # (bt, n, 1)

        oh = jnp.einsum('bnm,bmd->bnd', p.astype(mxu_dtype), vh,
                        preferred_element_type=jnp.float32)      # (bt, n, d) f32
        # Normalize after the PV matmul: divide n*d elements instead of n*m,
        # using the EUP reciprocal slot.  Exactly equivalent math.
        head_outs.append(oh * pl.reciprocal(denom, approx=True))

    out = jnp.concatenate(head_outs, axis=-1)                    # 'b n (h d)' layout

    # Output projection (Linear with bias), lane-dense output store.
    y = jnp.dot(out.reshape(bt * n, inner).astype(mxu_dtype),
                wo_ref[...].astype(mxu_dtype),
                preferred_element_type=jnp.float32)
    y = y + b_ref[...].astype(jnp.float32)                       # (1, dq) broadcast
    o_ref[...] = y.reshape(bt, n, dq).astype(o_ref.dtype)

    # TODO(synk): the optional boolean attention mask and the hypernetwork k/v
    # remap are host-side branches (None / disabled in this forward) and are not
    # implemented in the kernel.


def cross_attention(x, context, w_q, w_k, w_v, w_out, b_out, *,
                    heads, dim_head, batch_block=1, mxu_dtype=jnp.bfloat16):
    """x: (B, N, query_dim); context: (B, M, context_dim).

    Weights use PyTorch nn.Linear layout: w_* is (out_features, in_features).
    """
    B, N, Dq = x.shape
    Bc, M, Dc = context.shape
    inner = heads * dim_head
    assert Bc == B
    assert w_q.shape == (inner, Dq)
    assert w_k.shape == (inner, Dc)
    assert w_v.shape == (inner, Dc)
    assert w_out.shape == (Dq, inner)
    assert b_out.shape == (Dq,)
    assert B % batch_block == 0, "batch_block must divide B"
    scale = float(dim_head) ** -0.5

    # Lane-dense, canonical-contraction weight layout: (in_dim, out_dim).
    # K and V weights are fused lane-wise so the kernel does one wide matmul.
    wq_t = jnp.asarray(w_q).T
    wkv_t = jnp.concatenate([jnp.asarray(w_k).T, jnp.asarray(w_v).T], axis=1)  # (Dc, 2*inner)
    wo_t = jnp.asarray(w_out).T
    bias2 = jnp.asarray(b_out).reshape(1, Dq)

    kernel = functools.partial(cross_attention_kernel, heads=heads,
                               dim_head=dim_head, scale=scale,
                               mxu_dtype=mxu_dtype)

    grid = (B // batch_block,)
    flops = 2 * B * (N * Dq * inner + 2 * M * Dc * inner
                     + 2 * heads * N * M * dim_head + N * inner * Dq)
    bytes_accessed = 4 * (x.size + context.size + w_q.size + w_k.size
                          + w_v.size + w_out.size + b_out.size + B * N * Dq)
    cost = pl.CostEstimate(flops=flops,
                           transcendentals=B * heads * N * M,
                           bytes_accessed=bytes_accessed)

    return pl.pallas_call(
        kernel,
        out_shape=jax.ShapeDtypeStruct((B, N, Dq), x.dtype),
        grid_spec=pltpu.PrefetchScalarGridSpec(
            num_scalar_prefetch=0,
            grid=grid,
            in_specs=[
                pl.BlockSpec((batch_block, N, Dq), lambda b: (b, 0, 0)),   # x
                pl.BlockSpec((batch_block, M, Dc), lambda b: (b, 0, 0)),   # context
                pl.BlockSpec((Dq, inner), lambda b: (0, 0)),               # Wq^T
                pl.BlockSpec((Dc, 2 * inner), lambda b: (0, 0)),           # [Wk^T | Wv^T]
                pl.BlockSpec((inner, Dq), lambda b: (0, 0)),               # Wout^T
                pl.BlockSpec((1, Dq), lambda b: (0, 0)),                   # bias (lane-dense)
            ],
            out_specs=pl.BlockSpec((batch_block, N, Dq), lambda b: (b, 0, 0)),
        ),
        compiler_params=pltpu.CompilerParams(
            dimension_semantics=("parallel",),       # >=2 steps -> both v7x TCs busy
            vmem_limit_bytes=32 * 1024 * 1024,       # explicit; safe on v5e/v6e/v7x
        ),
        cost_estimate=cost,
    )(x, context, wq_t, wkv_t, wo_t, bias2)


def cross_attention_ref(x, context, w_q, w_k, w_v, w_out, b_out, *, heads, dim_head):
    """Pure-JAX f32 reference matching the PyTorch CrossAttention.forward."""
    scale = float(dim_head) ** -0.5
    B, N, _ = x.shape
    M = context.shape[1]
    inner = heads * dim_head
    q = jnp.einsum('bnc,ic->bni', x, w_q)
    k = jnp.einsum('bmc,ic->bmi', context, w_k)
    v = jnp.einsum('bmc,ic->bmi', context, w_v)
    q = q.reshape(B, N, heads, dim_head).transpose(0, 2, 1, 3)
    k = k.reshape(B, M, heads, dim_head).transpose(0, 2, 1, 3)
    v = v.reshape(B, M, heads, dim_head).transpose(0, 2, 1, 3)
    s = jnp.einsum('bhnd,bhmd->bhnm', q, k) * scale
    p = jax.nn.softmax(s, axis=-1)
    o = jnp.einsum('bhnm,bhmd->bhnd', p, v)
    o = o.transpose(0, 2, 1, 3).reshape(B, N, inner)
    return jnp.einsum('bni,oi->bno', o, w_out) + b_out[None, None, :]


if __name__ == "__main__":
    # Small config consistent with the module (inner_dim = heads * dim_head = 128).
    B, N, M = 2, 128, 128
    query_dim, context_dim = 128, 64
    heads, dim_head = 4, 32
    inner = heads * dim_head

    key = jax.random.PRNGKey(0)
    kx, kc, kq, kk, kv, ko, kb = jax.random.split(key, 7)
    x = jax.random.normal(kx, (B, N, query_dim), dtype=jnp.float32)
    context = jax.random.normal(kc, (B, M, context_dim), dtype=jnp.float32)
    w_q = jax.random.normal(kq, (inner, query_dim), dtype=jnp.float32) * (query_dim ** -0.5)
    w_k = jax.random.normal(kk, (inner, context_dim), dtype=jnp.float32) * (context_dim ** -0.5)
    w_v = jax.random.normal(kv, (inner, context_dim), dtype=jnp.float32) * (context_dim ** -0.5)
    w_out = jax.random.normal(ko, (query_dim, inner), dtype=jnp.float32) * (inner ** -0.5)
    b_out = jax.random.normal(kb, (query_dim,), dtype=jnp.float32) * 0.02

    out = cross_attention(x, context, w_q, w_k, w_v, w_out, b_out,
                          heads=heads, dim_head=dim_head, batch_block=1)
    out = jax.block_until_ready(out)

    ref = cross_attention_ref(x, context, w_q, w_k, w_v, w_out, b_out,
                              heads=heads, dim_head=dim_head)
    assert out.shape == (B, N, query_dim)
    max_err = float(jnp.max(jnp.abs(out - ref)))
    # bf16 MXU operands with f32 accumulation -> loose-but-meaningful tolerance.
    assert jnp.allclose(out, ref, atol=3e-2, rtol=3e-2), \
        f"mismatch vs reference (max abs err {max_err})"
    print("KERNEL_OK")
</pallas_src>

<mosaic_0001>
module attributes {stable_mosaic.version = 11 : i64} {
  func.func @cross_attention_kernel(%arg0: i32, %arg1: memref<1x128x128xf32, #tpu.memory_space<vmem>>, %arg2: memref<1x128x64xf32, #tpu.memory_space<vmem>>, %arg3: memref<128x128xf32, #tpu.memory_space<vmem>>, %arg4: memref<64x256xf32, #tpu.memory_space<vmem>>, %arg5: memref<128x128xf32, #tpu.memory_space<vmem>>, %arg6: memref<1x128xf32, #tpu.memory_space<vmem>>, %arg7: memref<1x128x128xf32, #tpu.memory_space<vmem>>) attributes {dimension_semantics = [#tpu.dimension_semantics<parallel>], iteration_bounds = array<i64: 2>, scalar_prefetch = 0 : i64, scratch_operands = 0 : i64, tpu.core_type = #tpu.core_type<tc>, window_params = [{transform_indices = @transform_0, window_bounds = array<i64: 1, 128, 128>}, {transform_indices = @transform_1, window_bounds = array<i64: 1, 128, 64>}, {pipeline_mode = #tpu.pipeline_mode<synchronous>, transform_indices = @transform_2, window_bounds = array<i64: 128, 128>}, {pipeline_mode = #tpu.pipeline_mode<synchronous>, transform_indices = @transform_3, window_bounds = array<i64: 64, 256>}, {pipeline_mode = #tpu.pipeline_mode<synchronous>, transform_indices = @transform_4, window_bounds = array<i64: 128, 128>}, {pipeline_mode = #tpu.pipeline_mode<synchronous>, transform_indices = @transform_5, window_bounds = array<i64: 1, 128>}, {transform_indices = @transform_6, window_bounds = array<i64: 1, 128, 128>}]} {
    %c0 = arith.constant 0 : index
    %c0_0 = arith.constant 0 : index
    %c0_1 = arith.constant 0 : index
    %0 = vector.load %arg1[%c0, %c0_0, %c0_1] : memref<1x128x128xf32, #tpu.memory_space<vmem>>, vector<1x128x128xf32>
    %1 = vector.shape_cast %0 : vector<1x128x128xf32> to vector<128x128xf32>
    %2 = arith.truncf %1 : vector<128x128xf32> to vector<128x128xbf16>
    %c0_2 = arith.constant 0 : index
    %c0_3 = arith.constant 0 : index
    %c0_4 = arith.constant 0 : index
    %3 = vector.load %arg2[%c0_2, %c0_3, %c0_4] : memref<1x128x64xf32, #tpu.memory_space<vmem>>, vector<1x128x64xf32>
    %4 = vector.shape_cast %3 : vector<1x128x64xf32> to vector<128x64xf32>
    %5 = arith.truncf %4 : vector<128x64xf32> to vector<128x64xbf16>
    %c0_5 = arith.constant 0 : index
    %c0_6 = arith.constant 0 : index
    %6 = vector.load %arg3[%c0_5, %c0_6] : memref<128x128xf32, #tpu.memory_space<vmem>>, vector<128x128xf32>
    %7 = arith.truncf %6 : vector<128x128xf32> to vector<128x128xbf16>
    %cst = arith.constant dense<0.000000e+00> : vector<128x128xf32>
    %8 = tpu.matmul %2, %7, %cst {dimension_numbers = #tpu.dot_dimension_numbers<[1], [0], [0], [1], [0, 0, 1, 1], [], []>} : vector<128x128xbf16>, vector<128x128xbf16>, vector<128x128xf32> -> vector<128x128xf32>
    %c0_7 = arith.constant 0 : index
    %c0_8 = arith.constant 0 : index
    %9 = vector.load %arg4[%c0_7, %c0_8] : memref<64x256xf32, #tpu.memory_space<vmem>>, vector<64x256xf32>
    %10 = arith.truncf %9 : vector<64x256xf32> to vector<64x256xbf16>
    %cst_9 = arith.constant dense<0.000000e+00> : vector<128x256xf32>
    %11 = tpu.matmul %5, %10, %cst_9 {dimension_numbers = #tpu.dot_dimension_numbers<[1], [0], [0], [1], [0, 0, 1, 1], [], []>} : vector<128x64xbf16>, vector<64x256xbf16>, vector<128x256xf32> -> vector<128x256xf32>
    %cst_10 = arith.constant 0.176776692 : f32
    %12 = vector.broadcast %cst_10 : f32 to vector<128x128xf32>
    %13 = arith.mulf %8, %12 : vector<128x128xf32>
    %14 = vector.shape_cast %13 : vector<128x128xf32> to vector<1x128x128xf32>
    %15 = vector.extract_strided_slice %11 {offsets = [0, 0], sizes = [128, 128], strides = [1, 1]} : vector<128x256xf32> to vector<128x128xf32>
    %16 = vector.shape_cast %15 : vector<128x128xf32> to vector<1x128x128xf32>
    %17 = vector.extract_strided_slice %11 {offsets = [0, 128], sizes = [128, 128], strides = [1, 1]} : vector<128x256xf32> to vector<128x128xf32>
    %18 = vector.shape_cast %17 : vector<128x128xf32> to vector<1x128x128xf32>
    %19 = vector.extract_strided_slice %14 {offsets = [0, 0, 0], sizes = [1, 128, 32], strides = [1, 1, 1]} : vector<1x128x128xf32> to vector<1x128x32xf32>
    %20 = arith.truncf %19 : vector<1x128x32xf32> to vector<1x128x32xbf16>
    %21 = vector.extract_strided_slice %16 {offsets = [0, 0, 0], sizes = [1, 128, 32], strides = [1, 1, 1]} : vector<1x128x128xf32> to vector<1x128x32xf32>
    %22 = arith.truncf %21 : vector<1x128x32xf32> to vector<1x128x32xbf16>
    %23 = vector.extract_strided_slice %18 {offsets = [0, 0, 0], sizes = [1, 128, 32], strides = [1, 1, 1]} : vector<1x128x128xf32> to vector<1x128x32xf32>
    %24 = arith.truncf %23 : vector<1x128x32xf32> to vector<1x128x32xbf16>
    "tpu.trace_start"() <{level = 10 : i32, message = "bnd,bmd->bnm"}> : () -> ()
    %cst_11 = arith.constant dense<0.000000e+00> : vector<1x128x128xf32>
    %25 = tpu.matmul %20, %22, %cst_11 {dimension_numbers = #tpu.dot_dimension_numbers<[2], [2], [1], [1], [0, 0, 0, 1, 1, 1], [0], [0]>} : vector<1x128x32xbf16>, vector<1x128x32xbf16>, vector<1x128x128xf32> -> vector<1x128x128xf32>
    "tpu.trace_stop"() : () -> ()
    %cst_12 = arith.constant dense<0xFF800000> : vector<1x128xf32>
    %26 = vector.multi_reduction <maximumf>, %25, %cst_12 [2] : vector<1x128x128xf32> to vector<1x128xf32>
    %27 = vector.shape_cast %26 : vector<1x128xf32> to vector<1x128x1xf32>
    %28 = vector.broadcast %27 : vector<1x128x1xf32> to vector<1x128x128xf32>
    %29 = arith.subf %25, %28 : vector<1x128x128xf32>
    %30 = math.exp %29 : vector<1x128x128xf32>
    %cst_13 = arith.constant dense<0.000000e+00> : vector<1x128xf32>
    %31 = vector.multi_reduction <add>, %30, %cst_13 [2] : vector<1x128x128xf32> to vector<1x128xf32>
    %32 = vector.shape_cast %31 : vector<1x128xf32> to vector<1x128x1xf32>
    %33 = arith.truncf %30 : vector<1x128x128xf32> to vector<1x128x128xbf16>
    "tpu.trace_start"() <{level = 10 : i32, message = "bnm,bmd->bnd"}> : () -> ()
    %cst_14 = arith.constant dense<0.000000e+00> : vector<1x128x32xf32>
    %34 = tpu.matmul %33, %24, %cst_14 {dimension_numbers = #tpu.dot_dimension_numbers<[2], [1], [1], [2], [0, 0, 0, 1, 1, 2], [0], [0]>} : vector<1x128x128xbf16>, vector<1x128x32xbf16>, vector<1x128x32xf32> -> vector<1x128x32xf32>
    "tpu.trace_stop"() : () -> ()
    %35 = tpu.reciprocal %32 {approx = true} : vector<1x128x1xf32> -> vector<1x128x1xf32>
    %36 = vector.broadcast %35 : vector<1x128x1xf32> to vector<1x128x32xf32>
    %37 = arith.mulf %34, %36 : vector<1x128x32xf32>
    %38 = vector.extract_strided_slice %14 {offsets = [0, 0, 32], sizes = [1, 128, 32], strides = [1, 1, 1]} : vector<1x128x128xf32> to vector<1x128x32xf32>
    %39 = arith.truncf %38 : vector<1x128x32xf32> to vector<1x128x32xbf16>
    %40 = vector.extract_strided_slice %16 {offsets = [0, 0, 32], sizes = [1, 128, 32], strides = [1, 1, 1]} : vector<1x128x128xf32> to vector<1x128x32xf32>
    %41 = arith.truncf %40 : vector<1x128x32xf32> to vector<1x128x32xbf16>
    %42 = vector.extract_strided_slice %18 {offsets = [0, 0, 32], sizes = [1, 128, 32], strides = [1, 1, 1]} : vector<1x128x128xf32> to vector<1x128x32xf32>
    %43 = arith.truncf %42 : vector<1x128x32xf32> to vector<1x128x32xbf16>
    "tpu.trace_start"() <{level = 10 : i32, message = "bnd,bmd->bnm"}> : () -> ()
    %cst_15 = arith.constant dense<0.000000e+00> : vector<1x128x128xf32>
    %44 = tpu.matmul %39, %41, %cst_15 {dimension_numbers = #tpu.dot_dimension_numbers<[2], [2], [1], [1], [0, 0, 0, 1, 1, 1], [0], [0]>} : vector<1x128x32xbf16>, vector<1x128x32xbf16>, vector<1x128x128xf32> -> vector<1x128x128xf32>
    "tpu.trace_stop"() : () -> ()
    %cst_16 = arith.constant dense<0xFF800000> : vector<1x128xf32>
    %45 = vector.multi_reduction <maximumf>, %44, %cst_16 [2] : vector<1x128x128xf32> to vector<1x128xf32>
    %46 = vector.shape_cast %45 : vector<1x128xf32> to vector<1x128x1xf32>
    %47 = vector.broadcast %46 : vector<1x128x1xf32> to vector<1x128x128xf32>
    %48 = arith.subf %44, %47 : vector<1x128x128xf32>
    %49 = math.exp %48 : vector<1x128x128xf32>
    %cst_17 = arith.constant dense<0.000000e+00> : vector<1x128xf32>
    %50 = vector.multi_reduction <add>, %49, %cst_17 [2] : vector<1x128x128xf32> to vector<1x128xf32>
    %51 = vector.shape_cast %50 : vector<1x128xf32> to vector<1x128x1xf32>
    %52 = arith.truncf %49 : vector<1x128x128xf32> to vector<1x128x128xbf16>
    "tpu.trace_start"() <{level = 10 : i32, message = "bnm,bmd->bnd"}> : () -> ()
    %cst_18 = arith.constant dense<0.000000e+00> : vector<1x128x32xf32>
    %53 = tpu.matmul %52, %43, %cst_18 {dimension_numbers = #tpu.dot_dimension_numbers<[2], [1], [1], [2], [0, 0, 0, 1, 1, 2], [0], [0]>} : vector<1x128x128xbf16>, vector<1x128x32xbf16>, vector<1x128x32xf32> -> vector<1x128x32xf32>
    "tpu.trace_stop"() : () -> ()
    %54 = tpu.reciprocal %51 {approx = true} : vector<1x128x1xf32> -> vector<1x128x1xf32>
    %55 = vector.broadcast %54 : vector<1x128x1xf32> to vector<1x128x32xf32>
    %56 = arith.mulf %53, %55 : vector<1x128x32xf32>
    %57 = vector.extract_strided_slice %14 {offsets = [0, 0, 64], sizes = [1, 128, 32], strides = [1, 1, 1]} : vector<1x128x128xf32> to vector<1x128x32xf32>
    %58 = arith.truncf %57 : vector<1x128x32xf32> to vector<1x128x32xbf16>
    %59 = vector.extract_strided_slice %16 {offsets = [0, 0, 64], sizes = [1, 128, 32], strides = [1, 1, 1]} : vector<1x128x128xf32> to vector<1x128x32xf32>
    %60 = arith.truncf %59 : vector<1x128x32xf32> to vector<1x128x32xbf16>
    %61 = vector.extract_strided_slice %18 {offsets = [0, 0, 64], sizes = [1, 128, 32], strides = [1, 1, 1]} : vector<1x128x128xf32> to vector<1x128x32xf32>
    %62 = arith.truncf %61 : vector<1x128x32xf32> to vector<1x128x32xbf16>
    "tpu.trace_start"() <{level = 10 : i32, message = "bnd,bmd->bnm"}> : () -> ()
    %cst_19 = arith.constant dense<0.000000e+00> : vector<1x128x128xf32>
    %63 = tpu.matmul %58, %60, %cst_19 {dimension_numbers = #tpu.dot_dimension_numbers<[2], [2], [1], [1], [0, 0, 0, 1, 1, 1], [0], [0]>} : vector<1x128x32xbf16>, vector<1x128x32xbf16>, vector<1x128x128xf32> -> vector<1x128x128xf32>
    "tpu.trace_stop"() : () -> ()
    %cst_20 = arith.constant dense<0xFF800000> : vector<1x128xf32>
    %64 = vector.multi_reduction <maximumf>, %63, %cst_20 [2] : vector<1x128x128xf32> to vector<1x128xf32>
    %65 = vector.shape_cast %64 : vector<1x128xf32> to vector<1x128x1xf32>
    %66 = vector.broadcast %65 : vector<1x128x1xf32> to vector<1x128x128xf32>
    %67 = arith.subf %63, %66 : vector<1x128x128xf32>
    %68 = math.exp %67 : vector<1x128x128xf32>
    %cst_21 = arith.constant dense<0.000000e+00> : vector<1x128xf32>
    %69 = vector.multi_reduction <add>, %68, %cst_21 [2] : vector<1x128x128xf32> to vector<1x128xf32>
    %70 = vector.shape_cast %69 : vector<1x128xf32> to vector<1x128x1xf32>
    %71 = arith.truncf %68 : vector<1x128x128xf32> to vector<1x128x128xbf16>
    "tpu.trace_start"() <{level = 10 : i32, message = "bnm,bmd->bnd"}> : () -> ()
    %cst_22 = arith.constant dense<0.000000e+00> : vector<1x128x32xf32>
    %72 = tpu.matmul %71, %62, %cst_22 {dimension_numbers = #tpu.dot_dimension_numbers<[2], [1], [1], [2], [0, 0, 0, 1, 1, 2], [0], [0]>} : vector<1x128x128xbf16>, vector<1x128x32xbf16>, vector<1x128x32xf32> -> vector<1x128x32xf32>
    "tpu.trace_stop"() : () -> ()
    %73 = tpu.reciprocal %70 {approx = true} : vector<1x128x1xf32> -> vector<1x128x1xf32>
    %74 = vector.broadcast %73 : vector<1x128x1xf32> to vector<1x128x32xf32>
    %75 = arith.mulf %72, %74 : vector<1x128x32xf32>
    %76 = vector.extract_strided_slice %14 {offsets = [0, 0, 96], sizes = [1, 128, 32], strides = [1, 1, 1]} : vector<1x128x128xf32> to vector<1x128x32xf32>
    %77 = arith.truncf %76 : vector<1x128x32xf32> to vector<1x128x32xbf16>
    %78 = vector.extract_strided_slice %16 {offsets = [0, 0, 96], sizes = [1, 128, 32], strides = [1, 1, 1]} : vector<1x128x128xf32> to vector<1x128x32xf32>
    %79 = arith.truncf %78 : vector<1x128x32xf32> to vector<1x128x32xbf16>
    %80 = vector.extract_strided_slice %18 {offsets = [0, 0, 96], sizes = [1, 128, 32], strides = [1, 1, 1]} : vector<1x128x128xf32> to vector<1x128x32xf32>
    %81 = arith.truncf %80 : vector<1x128x32xf32> to vector<1x128x32xbf16>
    "tpu.trace_start"() <{level = 10 : i32, message = "bnd,bmd->bnm"}> : () -> ()
    %cst_23 = arith.constant dense<0.000000e+00> : vector<1x128x128xf32>
    %82 = tpu.matmul %77, %79, %cst_23 {dimension_numbers = #tpu.dot_dimension_numbers<[2], [2], [1], [1], [0, 0, 0, 1, 1, 1], [0], [0]>} : vector<1x128x32xbf16>, vector<1x128x32xbf16>, vector<1x128x128xf32> -> vector<1x128x128xf32>
    "tpu.trace_stop"() : () -> ()
    %cst_24 = arith.constant dense<0xFF800000> : vector<1x128xf32>
    %83 = vector.multi_reduction <maximumf>, %82, %cst_24 [2] : vector<1x128x128xf32> to vector<1x128xf32>
    %84 = vector.shape_cast %83 : vector<1x128xf32> to vector<1x128x1xf32>
    %85 = vector.broadcast %84 : vector<1x128x1xf32> to vector<1x128x128xf32>
    %86 = arith.subf %82, %85 : vector<1x128x128xf32>
    %87 = math.exp %86 : vector<1x128x128xf32>
    %cst_25 = arith.constant dense<0.000000e+00> : vector<1x128xf32>
    %88 = vector.multi_reduction <add>, %87, %cst_25 [2] : vector<1x128x128xf32> to vector<1x128xf32>
    %89 = vector.shape_cast %88 : vector<1x128xf32> to vector<1x128x1xf32>
    %90 = arith.truncf %87 : vector<1x128x128xf32> to vector<1x128x128xbf16>
    "tpu.trace_start"() <{level = 10 : i32, message = "bnm,bmd->bnd"}> : () -> ()
    %cst_26 = arith.constant dense<0.000000e+00> : vector<1x128x32xf32>
    %91 = tpu.matmul %90, %81, %cst_26 {dimension_numbers = #tpu.dot_dimension_numbers<[2], [1], [1], [2], [0, 0, 0, 1, 1, 2], [0], [0]>} : vector<1x128x128xbf16>, vector<1x128x32xbf16>, vector<1x128x32xf32> -> vector<1x128x32xf32>
    "tpu.trace_stop"() : () -> ()
    %92 = tpu.reciprocal %89 {approx = true} : vector<1x128x1xf32> -> vector<1x128x1xf32>
    %93 = vector.broadcast %92 : vector<1x128x1xf32> to vector<1x128x32xf32>
    %94 = arith.mulf %91, %93 : vector<1x128x32xf32>
    %95 = tpu.concatenate %37, %56, %75, %94 in 2 : vector<1x128x32xf32>, vector<1x128x32xf32>, vector<1x128x32xf32>, vector<1x128x32xf32> -> vector<1x128x128xf32>
    %96 = vector.shape_cast %95 : vector<1x128x128xf32> to vector<128x128xf32>
    %97 = arith.truncf %96 : vector<128x128xf32> to vector<128x128xbf16>
    %c0_27 = arith.constant 0 : index
    %c0_28 = arith.constant 0 : index
    %98 = vector.load %arg5[%c0_27, %c0_28] : memref<128x128xf32, #tpu.memory_space<vmem>>, vector<128x128xf32>
    %99 = arith.truncf %98 : vector<128x128xf32> to vector<128x128xbf16>
    %cst_29 = arith.constant dense<0.000000e+00> : vector<128x128xf32>
    %100 = tpu.matmul %97, %99, %cst_29 {dimension_numbers = #tpu.dot_dimension_numbers<[1], [0], [0], [1], [0, 0, 1, 1], [], []>} : vector<128x128xbf16>, vector<128x128xbf16>, vector<128x128xf32> -> vector<128x128xf32>
    %c0_30 = arith.constant 0 : index
    %c0_31 = arith.constant 0 : index
    %101 = vector.load %arg6[%c0_30, %c0_31] : memref<1x128xf32, #tpu.memory_space<vmem>>, vector<1x128xf32>
    %102 = vector.broadcast %101 : vector<1x128xf32> to vector<128x128xf32>
    %103 = arith.addf %100, %102 : vector<128x128xf32>
    %104 = vector.shape_cast %103 : vector<128x128xf32> to vector<1x128x128xf32>
    %c0_32 = arith.constant 0 : index
    %c0_33 = arith.constant 0 : index
    %c0_34 = arith.constant 0 : index
    %105 = vector.load %arg7[%c0_32, %c0_33, %c0_34] : memref<1x128x128xf32, #tpu.memory_space<vmem>>, vector<1x128x128xf32>
    tpu.vector_store %arg7[%c0_32, %c0_33, %c0_34], %104 {strides = array<i32>} : memref<1x128x128xf32, #tpu.memory_space<vmem>>, vector<1x128x128xf32>,
    return
  }
  func.func @transform_0(%arg0: i32) -> (i32, i32, i32) {
    %c0_i32 = arith.constant 0 : i32
    %c0_i32_0 = arith.constant 0 : i32
    %c0_i32_1 = arith.constant 0 : i32
    return %arg0, %c0_i32, %c0_i32_0 : i32, i32, i32
  }
  func.func @transform_1(%arg0: i32) -> (i32, i32, i32) {
    %c0_i32 = arith.constant 0 : i32
    %c0_i32_0 = arith.constant 0 : i32
    %c0_i32_1 = arith.constant 0 : i32
    return %arg0, %c0_i32, %c0_i32_0 : i32, i32, i32
  }
  func.func @transform_2(%arg0: i32) -> (i32, i32) {
    %c0_i32 = arith.constant 0 : i32
    %c0_i32_0 = arith.constant 0 : i32
    %c0_i32_1 = arith.constant 0 : i32
    return %c0_i32, %c0_i32_0 : i32, i32
  }
  func.func @transform_3(%arg0: i32) -> (i32, i32) {
    %c0_i32 = arith.constant 0 : i32
    %c0_i32_0 = arith.constant 0 : i32
    %c0_i32_1 = arith.constant 0 : i32
    return %c0_i32, %c0_i32_0 : i32, i32
  }
  func.func @transform_4(%arg0: i32) -> (i32, i32) {
    %c0_i32 = arith.constant 0 : i32
    %c0_i32_0 = arith.constant 0 : i32
    %c0_i32_1 = arith.constant 0 : i32
    return %c0_i32, %c0_i32_0 : i32, i32
  }
  func.func @transform_5(%arg0: i32) -> (i32, i32) {
    %c0_i32 = arith.constant 0 : i32
    %c0_i32_0 = arith.constant 0 : i32
    %c0_i32_1 = arith.constant 0 : i32
    return %c0_i32, %c0_i32_0 : i32, i32
  }
  func.func @transform_6(%arg0: i32) -> (i32, i32, i32) {
    %c0_i32 = arith.constant 0 : i32
    %c0_i32_0 = arith.constant 0 : i32
    %c0_i32_1 = arith.constant 0 : i32
    return %arg0, %c0_i32, %c0_i32_0 : i32, i32, i32
  }
}

</mosaic_0001>

<llo_original>
// kernel: tpu_custom_call.1
$region0: #{tpu_custom_call.1}
  #allocation0 [shape = 'u32[]', space=smem, size = 0x4, offset = 0x4, fixed_abs, tag = 'smem constant byte address 0x4 - core index']
  #allocation1 [shape = 'u32[72,128]{1,0:T(1,128)}', space=vmem, size = 0x9000, scoped, tag = 'internal scratch']
  %s0 = inlined_call_operand.vmem [shape: f32[2,128,128], index: 0, kind: input, shape index: {}]
  %s1 = inlined_call_operand.vmem [shape: f32[2,128,64], index: 1, kind: input, shape index: {}]
  %s2 = inlined_call_operand.vmem [shape: f32[128,128], index: 2, kind: input, shape index: {}]
  %s3 = inlined_call_operand.hbm [shape: f32[64,256], index: 3, kind: input, shape index: {}]
  %s4 = inlined_call_operand.hbm [shape: f32[128,128], index: 4, kind: input, shape index: {}]
  %s5 = inlined_call_operand.vmem [shape: f32[1,128], index: 5, kind: input, shape index: {}]
  %s6 = inlined_call_operand.hbm [shape: f32[2,128,128], index: 6, kind: output, shape index: {}]
  %s7 = sld [smem:[#allocation0]]
  $region65: #{tpu_custom_call.1} parent=0
    _
  %s9 = ssub.s32 1, %s7
  %s10 = scalar_select 0, %s9, %s7
  $region1: #{tpu_custom_call.1} parent=0
    #allocation2 [shape = 'u8[65536]{0}', space=vmem, size = 0x10000, scoped, tag = 'input window, operand 3, single buffered']
    #allocation3 [shape = 's32[2]{0}', space=sflag, size = 0x8, scoped, tag = 'scoped memory for tpu_custom_call.1']
    #allocation4 [shape = 's32[2]{0}', space=sflag, size = 0x8, scoped, tag = 'scoped memory for tpu_custom_call.1']
    #allocation5 [shape = 'u8[65536]{0}', space=vmem, size = 0x10000, scoped, tag = 'input window, operand 4, single buffered']
    #allocation6 [shape = 's32[1]{0}', space=sflag, size = 0x4, scoped, tag = 'scoped memory for tpu_custom_call.1']
    #allocation7 [shape = 'u8[131072]{0}', space=vmem, size = 0x20000, scoped, tag = 'output window, operand 0']
    %11 = vsyncpa [#allocation3], 0
    %12 = vsyncpa [#allocation6], 0
    %13 = vsyncpa [#allocation4], 0
    %s14 = scalar_lea.sflag [#allocation4], 1
    %15 = vsyncpa %s14, 0
    loop: start=0, step=1, limit=4
    $region2: #{tpu_custom_call.1} parent=1 // loop_pre_header
      _
    $region3: #{tpu_custom_call.1} parent=1 // loop_header
      %s17 = sphi 0, %s21
      %p18 = scmp.ge.s32.totalorder %s17, 4
      %s27 = sphi 0, %s29
      %s30 = sphi 0, %s27
      %s31 = sphi 0, %s30
      %s47 = sphi 0, %s31
      %s53 = sphi 0, %s55
      %s56 = sphi 0, %s53
      %s57 = sphi 0, %s56
      %s73 = sphi 0, %s57
      %s77 = sphi 0, %s77
      %s79 = sphi 0, %s77
      %s80 = sphi 0, %s79
      %s94 = sphi 0, %s80
      %s98 = sphi 0, %s98
      %s100 = sphi 0, %s98
      %s101 = sphi 0, %s100
      %s115 = sphi 0, %s101
      %s119 = sphi 0, %s119
      %s121 = sphi 0, %s119
      %s122 = sphi 0, %s121
      %s136 = sphi 0, %s122
      %s140 = sphi 0, %s140
      %s142 = sphi 0, %s140
      %s143 = sphi 0, %s142
      %s157 = sphi 0, %s143
      %s163 = sphi 0, %s165
      %s166 = sphi 0, %s163
      %s167 = sphi 0, %s166
      %s183 = sphi 0, %s167
    $region4: #{tpu_custom_call.1} parent=1 // loop_header_branch
      %20 = sbr.rel (%p18) target = $region8
    $region5: #{tpu_custom_call.1} parent=1 // loop_body
      %s22 = ssub.s32 %s17, 1
      %s23 = ssub.s32 %s17, 2
      %s24 = sadd.s32 %s17, 1
      %s25 = ssub.s32 %s17, %s24
      %p26 = scmp.eq.s32.totalorder %s25, 0
      %s28 = sadd.s32 %s27, 1
      %s29 = scalar_select %p26, %s27, %s28
      %p32 = pneg %p26
      %p33 = scmp.eq.s32.totalorder %s17, 1
      %p34 = por %p32, %p33
      %p35 = scmp.ne.s32.totalorder %s27, %s30
      %p36 = scmp.eq.s32.totalorder %s17, 0
      %p37 = por %p35, %p36
      %p38 = scmp.ne.s32.totalorder %s27, %s30
      %p39 = scmp.eq.s32.totalorder %s22, 1
      %p40 = por %p38, %p39
      %p41 = scmp.ne.s32.totalorder %s30, %s31
      %p42 = scmp.eq.s32.totalorder %s22, 0
      %p43 = por %p41, %p42
      %p44 = scmp.ne.s32.totalorder %s30, %s31
      %p45 = scmp.eq.s32.totalorder %s23, 1
      %p46 = por %p44, %p45
      %p48 = scmp.ne.s32.totalorder %s31, %s47
      %p49 = scmp.eq.s32.totalorder %s23, 0
      %p50 = por %p48, %p49
      %s51 = ssub.s32 %s17, %s24
      %p52 = scmp.eq.s32.totalorder %s51, 0
      %s54 = sadd.s32 %s53, 1
      %s55 = scalar_select %p52, %s53, %s54
      %p58 = pneg %p52
      %p59 = scmp.eq.s32.totalorder %s17, 1
      %p60 = por %p58, %p59
      %p61 = scmp.ne.s32.totalorder %s53, %s56
      %p62 = scmp.eq.s32.totalorder %s17, 0
      %p63 = por %p61, %p62
      %p64 = scmp.ne.s32.totalorder %s53, %s56
      %p65 = scmp.eq.s32.totalorder %s22, 1
      %p66 = por %p64, %p65
      %p67 = scmp.ne.s32.totalorder %s56, %s57
      %p68 = scmp.eq.s32.totalorder %s22, 0
      %p69 = por %p67, %p68
      %p70 = scmp.ne.s32.totalorder %s56, %s57
      %p71 = scmp.eq.s32.totalorder %s23, 1
      %p72 = por %p70, %p71
      %p74 = scmp.ne.s32.totalorder %s57, %s73
      %p75 = scmp.eq.s32.totalorder %s23, 0
      %p76 = por %p74, %p75
      %s78 = sadd.s32 %s77, 1
      %p81 = scmp.eq.s32.totalorder %s17, 1
      %p82 = scmp.ne.s32.totalorder %s77, %s79
      %p83 = scmp.eq.s32.totalorder %s17, 0
      %p84 = por %p82, %p83
      %p85 = scmp.ne.s32.totalorder %s77, %s79
      %p86 = scmp.eq.s32.totalorder %s22, 1
      %p87 = por %p85, %p86
      %p88 = scmp.ne.s32.totalorder %s79, %s80
      %p89 = scmp.eq.s32.totalorder %s22, 0
      %p90 = por %p88, %p89
      %p91 = scmp.ne.s32.totalorder %s79, %s80
      %p92 = scmp.eq.s32.totalorder %s23, 1
      %p93 = por %p91, %p92
      %p95 = scmp.ne.s32.totalorder %s80, %s94
      %p96 = scmp.eq.s32.totalorder %s23, 0
      %p97 = por %p95, %p96
      %s99 = sadd.s32 %s98, 1
      %p102 = scmp.eq.s32.totalorder %s17, 1
      %p103 = scmp.ne.s32.totalorder %s98, %s100
      %p104 = scmp.eq.s32.totalorder %s17, 0
      %p105 = por %p103, %p104
      %p106 = scmp.ne.s32.totalorder %s98, %s100
      %p107 = scmp.eq.s32.totalorder %s22, 1
      %p108 = por %p106, %p107
      %p109 = scmp.ne.s32.totalorder %s100, %s101
      %p110 = scmp.eq.s32.totalorder %s22, 0
      %p111 = por %p109, %p110
      %p112 = scmp.ne.s32.totalorder %s100, %s101
      %p113 = scmp.eq.s32.totalorder %s23, 1
      %p114 = por %p112, %p113
      %p116 = scmp.ne.s32.totalorder %s101, %s115
      %p117 = scmp.eq.s32.totalorder %s23, 0
      %p118 = por %p116, %p117
      %s120 = sadd.s32 %s119, 1
      %p123 = scmp.eq.s32.totalorder %s17, 1
      %p124 = scmp.ne.s32.totalorder %s119, %s121
      %p125 = scmp.eq.s32.totalorder %s17, 0
      %p126 = por %p124, %p125
      %p127 = scmp.ne.s32.totalorder %s119, %s121
      %p128 = scmp.eq.s32.totalorder %s22, 1
      %p129 = por %p127, %p128
      %p130 = scmp.ne.s32.totalorder %s121, %s122
      %p131 = scmp.eq.s32.totalorder %s22, 0
      %p132 = por %p130, %p131
      %p133 = scmp.ne.s32.totalorder %s121, %s122
      %p134 = scmp.eq.s32.totalorder %s23, 1
      %p135 = por %p133, %p134
      %p137 = scmp.ne.s32.totalorder %s122, %s136
      %p138 = scmp.eq.s32.totalorder %s23, 0
      %p139 = por %p137, %p138
      %s141 = sadd.s32 %s140, 1
      %p144 = scmp.eq.s32.totalorder %s17, 1
      %p145 = scmp.ne.s32.totalorder %s140, %s142
      %p146 = scmp.eq.s32.totalorder %s17, 0
      %p147 = por %p145, %p146
      %p148 = scmp.ne.s32.totalorder %s140, %s142
      %p149 = scmp.eq.s32.totalorder %s22, 1
      %p150 = por %p148, %p149
      %p151 = scmp.ne.s32.totalorder %s142, %s143
      %p152 = scmp.eq.s32.totalorder %s22, 0
      %p153 = por %p151, %p152
      %p154 = scmp.ne.s32.totalorder %s142, %s143
      %p155 = scmp.eq.s32.totalorder %s23, 1
      %p156 = por %p154, %p155
      %p158 = scmp.ne.s32.totalorder %s143, %s157
      %p159 = scmp.eq.s32.totalorder %s23, 0
      %p160 = por %p158, %p159
      %s161 = ssub.s32 %s17, %s24
      %p162 = scmp.eq.s32.totalorder %s161, 0
      %s164 = sadd.s32 %s163, 1
      %s165 = scalar_select %p162, %s163, %s164
      %p168 = pneg %p162
      %p169 = scmp.eq.s32.totalorder %s17, 1
      %p170 = por %p168, %p169
      %p171 = scmp.ne.s32.totalorder %s163, %s166
      %p172 = scmp.eq.s32.totalorder %s17, 0
      %p173 = por %p171, %p172
      %p174 = scmp.ne.s32.totalorder %s163, %s166
      %p175 = scmp.eq.s32.totalorder %s22, 1
      %p176 = por %p174, %p175
      %p177 = scmp.ne.s32.totalorder %s166, %s167
      %p178 = scmp.eq.s32.totalorder %s22, 0
      %p179 = por %p177, %p178
      %p180 = scmp.ne.s32.totalorder %s166, %s167
      %p181 = scmp.eq.s32.totalorder %s23, 1
      %p182 = por %p180, %p181
      %p184 = scmp.ne.s32.totalorder %s167, %s183
      %p185 = scmp.eq.s32.totalorder %s23, 0
      %p186 = por %p184, %p185
      %p187 = scmp.le.s32.totalorder 1, %s17
      %p188 = scmp.lt.s32.totalorder %s17, 3
      %p189 = pnand %p187, %p188
      %p190 = pneg %p189
      // Predicated region
      $region9: #{tpu_custom_call.1} parent=5 // pred_check
        _
      $region10: #{tpu_custom_call.1} parent=5 // pred_check_branch
        %192 = sbr.rel (%p189) target = $region12
      $region11: #{tpu_custom_call.1} parent=5 // pred_region
        %s193 = ssub.s32 %s17, 1
        // Predicated region
        $region13: #{tpu_custom_call.1} parent=11 // pred_check
          %p194 = pneg %p90
        $region14: #{tpu_custom_call.1} parent=11 // pred_check_branch
          %196 = sbr.rel (%p194) target = $region16
        $region15: #{tpu_custom_call.1} parent=11 // pred_region
          _
        $region16: #{tpu_custom_call.1} parent=11 // pred_fallthru
          _
        // Predicated region
        $region17: #{tpu_custom_call.1} parent=11 // pred_check
          %p197 = pneg %p111
        $region18: #{tpu_custom_call.1} parent=11 // pred_check_branch
          %199 = sbr.rel (%p197) target = $region20
        $region19: #{tpu_custom_call.1} parent=11 // pred_region
          %201 = vsyncadd [#allocation3], 0
          %s202 = sshll.u32 %s3, 4
          %s203 = int_to_ptr.hbm [resolvable:$true] %s202
          %s204 = sshll.u32 [#allocation2], 4
          %s205 = int_to_ptr.vmem [resolvable:$true] %s204
          %210 = dma.hbm_to_vmem [thread:$0]  %s203, 2048, %s205, [#allocation3], 256, 256, 16
        $region20: #{tpu_custom_call.1} parent=11 // pred_fallthru
          _
        // Predicated region
        $region21: #{tpu_custom_call.1} parent=11 // pred_check
          %p211 = pneg %p132
        $region22: #{tpu_custom_call.1} parent=11 // pred_check_branch
          %213 = sbr.rel (%p211) target = $region24
        $region23: #{tpu_custom_call.1} parent=11 // pred_region
          %215 = vsyncadd [#allocation6], 0
          %s216 = sshll.u32 %s4, 4
          %s217 = int_to_ptr.hbm [resolvable:$true] %s216
          %s218 = sshll.u32 [#allocation5], 4
          %s219 = int_to_ptr.vmem [resolvable:$true] %s218
          %224 = dma.hbm_to_vmem [thread:$0]  %s217, 2048, %s219, [#allocation6], 128, 128, 8
        $region24: #{tpu_custom_call.1} parent=11 // pred_fallthru
          _
        // Predicated region
        $region25: #{tpu_custom_call.1} parent=11 // pred_check
          %p225 = pneg %p153
        $region26: #{tpu_custom_call.1} parent=11 // pred_check_branch
          %227 = sbr.rel (%p225) target = $region28
        $region27: #{tpu_custom_call.1} parent=11 // pred_region
          _
        $region28: #{tpu_custom_call.1} parent=11 // pred_fallthru
          _
      $region12: #{tpu_custom_call.1} parent=5 // pred_fallthru
        _
      %p228 = scmp.lt.s32.totalorder %s17, 2
      // Predicated region
      $region29: #{tpu_custom_call.1} parent=5 // pred_check
        %p229 = pneg %p228
      $region30: #{tpu_custom_call.1} parent=5 // pred_check_branch
        %231 = sbr.rel (%p229) target = $region32
      $region31: #{tpu_custom_call.1} parent=5 // pred_region
        // Predicated region
        $region33: #{tpu_custom_call.1} parent=31 // pred_check
          %p232 = pneg %p37
        $region34: #{tpu_custom_call.1} parent=31 // pred_check_branch
          %234 = sbr.rel (%p232) target = $region36
        $region35: #{tpu_custom_call.1} parent=31 // pred_region
          %p235 = scmp.lt.s32.totalorder %s17, 1
          %s236 = scalar_select %p235, %s17, 1
          %s237 = smul.addr %s236, 16
          %s238 = smul.addr %s237, 8
          %s239 = scalar_lea.vmem %s0, %s238
        $region36: #{tpu_custom_call.1} parent=31 // pred_fallthru
          _
        // Predicated region
        $region37: #{tpu_custom_call.1} parent=31 // pred_check
          %p240 = pneg %p63
        $region38: #{tpu_custom_call.1} parent=31 // pred_check_branch
          %242 = sbr.rel (%p240) target = $region40
        $region39: #{tpu_custom_call.1} parent=31 // pred_region
          %p243 = scmp.lt.s32.totalorder %s17, 1
          %s244 = scalar_select %p243, %s17, 1
          %s245 = smul.addr %s244, 16
          %s246 = smul.addr %s245, 8
          %s247 = scalar_lea.vmem %s1, %s246
        $region40: #{tpu_custom_call.1} parent=31 // pred_fallthru
          _
      $region32: #{tpu_custom_call.1} parent=5 // pred_fallthru
        _
      %p248 = scmp.le.s32.totalorder 1, %s17
      %p249 = scmp.lt.s32.totalorder %s17, 3
      %p250 = pnand %p248, %p249
      %p251 = pneg %p250
      // Predicated region
      $region41: #{tpu_custom_call.1} parent=5 // pred_check
        _
      $region42: #{tpu_custom_call.1} parent=5 // pred_check_branch
        %253 = sbr.rel (%p250) target = $region44
      $region43: #{tpu_custom_call.1} parent=5 // pred_region
        %s254 = ssub.s32 %s17, 1
        // Predicated region
        $region45: #{tpu_custom_call.1} parent=43 // pred_check
          %p255 = pneg %p111
        $region46: #{tpu_custom_call.1} parent=43 // pred_check_branch
          %257 = sbr.rel (%p255) target = $region48
        $region47: #{tpu_custom_call.1} parent=43 // pred_region
          %259 = dma.done [#allocation3], 2048
        $region48: #{tpu_custom_call.1} parent=43 // pred_fallthru
          _
        // Predicated region
        $region49: #{tpu_custom_call.1} parent=43 // pred_check
          %p260 = pneg %p132
        $region50: #{tpu_custom_call.1} parent=43 // pred_check_branch
          %262 = sbr.rel (%p260) target = $region52
        $region51: #{tpu_custom_call.1} parent=43 // pred_region
          %264 = dma.done [#allocation6], 2048
        $region52: #{tpu_custom_call.1} parent=43 // pred_fallthru
          _
        %p265 = scmp.lt.s32.totalorder %s22, 1
        %s266 = scalar_select %p265, %s22, 1
        %s267 = smul.addr %s266, 16
        %s268 = smul.addr %s267, 8
        %s269 = scalar_lea.vmem %s0, %s268
        %p270 = pneg %p43
        %p271 = pneg %p40
        %p272 = scmp.lt.s32.totalorder %s22, 1
        %s273 = scalar_select %p272, %s22, 1
        %s274 = smul.addr %s273, 16
        %s275 = smul.addr %s274, 8
        %s276 = scalar_lea.vmem %s1, %s275
        %p277 = pneg %p69
        %p278 = pneg %p66
        %p279 = pneg %p90
        %p280 = pneg %p87
        %p281 = pneg %p111
        %p282 = pneg %p108
        %p283 = pneg %p132
        %p284 = pneg %p129
        %p285 = pneg %p153
        %p286 = pneg %p150
        %p287 = pneg %p179
        %p288 = pneg %p176
        %s289 = sand.u32 %s166, 1
        %s290 = scalar_lea.sflag [#allocation4], %s289
        %s291 = sand.u32 %s166, 1
        %s292 = smul.addr %s291, 128
        %s293 = scalar_lea.vmem [#allocation7], %s292
        %p294 = scmp.lt.s32.totalorder %s22, 1
        %s295 = scalar_select %p294, %s22, 1
        %s296 = smul.addr %s295, 16
        %s297 = smul.addr %s296, 8
        %s298 = scalar_lea.vmem %s0, %s297
        %p299 = scmp.lt.s32.totalorder %s22, 1
        %s300 = scalar_select %p299, %s22, 1
        %s301 = smul.addr %s300, 16
        %s302 = smul.addr %s301, 8
        %s303 = scalar_lea.vmem %s1, %s302
        %v305 = vld [vmem:[%s298] sm:$0xff]
        %v306 = vld [vmem:[%s298 + $0x8] sm:$0xff]
        %v307 = vld [vmem:[%s298 + $0x10] sm:$0xff]
        %v308 = vld [vmem:[%s298 + $0x18] sm:$0xff]
        %v309 = vld [vmem:[%s298 + $0x20] sm:$0xff]
        %v310 = vld [vmem:[%s298 + $0x28] sm:$0xff]
        %v311 = vld [vmem:[%s298 + $0x30] sm:$0xff]
        %v312 = vld [vmem:[%s298 + $0x38] sm:$0xff]
        %v313 = vld [vmem:[%s298 + $0x40] sm:$0xff]
        %v314 = vld [vmem:[%s298 + $0x48] sm:$0xff]
        %v315 = vld [vmem:[%s298 + $0x50] sm:$0xff]
        %v316 = vld [vmem:[%s298 + $0x58] sm:$0xff]
        %v317 = vld [vmem:[%s298 + $0x60] sm:$0xff]
        %v318 = vld [vmem:[%s298 + $0x68] sm:$0xff]
        %v319 = vld [vmem:[%s298 + $0x70] sm:$0xff]
        %v320 = vld [vmem:[%s298 + $0x78] sm:$0xff]
        %v321 = vpack.c.bf16 %v306, %v305
        %v322 = vpack.c.bf16 %v308, %v307
        %v323 = vpack.c.bf16 %v310, %v309
        %v324 = vpack.c.bf16 %v312, %v311
        %v325 = vpack.c.bf16 %v314, %v313
        %v326 = vpack.c.bf16 %v316, %v315
        %v327 = vpack.c.bf16 %v318, %v317
        %v328 = vpack.c.bf16 %v320, %v319
        %v329 = vld [vmem:[%s303] sm:$0xff]
        %v330 = vld [vmem:[%s303 + $0x8] sm:$0xff]
        %v331 = vld [vmem:[%s303 + $0x10] sm:$0xff]
        %v332 = vld [vmem:[%s303 + $0x18] sm:$0xff]
        %v333 = vld [vmem:[%s303 + $0x20] sm:$0xff]
        %v334 = vld [vmem:[%s303 + $0x28] sm:$0xff]
        %v335 = vld [vmem:[%s303 + $0x30] sm:$0xff]
        %v336 = vld [vmem:[%s303 + $0x38] sm:$0xff]
        %v337 = vld [vmem:[%s303 + $0x40] sm:$0xff]
        %v338 = vld [vmem:[%s303 + $0x48] sm:$0xff]
        %v339 = vld [vmem:[%s303 + $0x50] sm:$0xff]
        %v340 = vld [vmem:[%s303 + $0x58] sm:$0xff]
        %v341 = vld [vmem:[%s303 + $0x60] sm:$0xff]
        %v342 = vld [vmem:[%s303 + $0x68] sm:$0xff]
        %v343 = vld [vmem:[%s303 + $0x70] sm:$0xff]
        %v344 = vld [vmem:[%s303 + $0x78] sm:$0xff]
        %v345 = vpack.c.bf16 %v330, %v329
        %v346 = vpack.c.bf16 %v332, %v331
        %v347 = vpack.c.bf16 %v334, %v333
        %v348 = vpack.c.bf16 %v336, %v335
        %v349 = vpack.c.bf16 %v338, %v337
        %v350 = vpack.c.bf16 %v340, %v339
        %v351 = vpack.c.bf16 %v342, %v341
        %v352 = vpack.c.bf16 %v344, %v343
        %v353 = vld [vmem:[%s2] sm:$0xff]
        %v354 = vld [vmem:[%s2 + $0x8] sm:$0xff]
        %v355 = vld [vmem:[%s2 + $0x10] sm:$0xff]
        %v356 = vld [vmem:[%s2 + $0x18] sm:$0xff]
        %v357 = vld [vmem:[%s2 + $0x20] sm:$0xff]
        %v358 = vld [vmem:[%s2 + $0x28] sm:$0xff]
        %v359 = vld [vmem:[%s2 + $0x30] sm:$0xff]
        %v360 = vld [vmem:[%s2 + $0x38] sm:$0xff]
        %v361 = vld [vmem:[%s2 + $0x40] sm:$0xff]
        %v362 = vld [vmem:[%s2 + $0x48] sm:$0xff]
        %v363 = vld [vmem:[%s2 + $0x50] sm:$0xff]
        %v364 = vld [vmem:[%s2 + $0x58] sm:$0xff]
        %v365 = vld [vmem:[%s2 + $0x60] sm:$0xff]
        %v366 = vld [vmem:[%s2 + $0x68] sm:$0xff]
        %v367 = vld [vmem:[%s2 + $0x70] sm:$0xff]
        %v368 = vld [vmem:[%s2 + $0x78] sm:$0xff]
        %v369 = vpack.c.bf16 %v354, %v353
        %v370 = vpack.c.bf16 %v356, %v355
        %v371 = vpack.c.bf16 %v358, %v357
        %v372 = vpack.c.bf16 %v360, %v359
        %v373 = vpack.c.bf16 %v362, %v361
        %v374 = vpack.c.bf16 %v364, %v363
        %v375 = vpack.c.bf16 %v366, %v365
        %v376 = vpack.c.bf16 %v368, %v367
        %377 = vmatpush.bf16.msra.mxu0 %v376
        %378 = vmatpush.bf16.msra.mxu0 %v375
        %379 = vmatpush.bf16.msra.mxu0 %v374
        %380 = vmatpush.bf16.msra.mxu0 %v373
        %381 = vmatpush.bf16.msra.mxu0 %v372
        %382 = vmatpush.bf16.msra.mxu0 %v371
        %383 = vmatpush.bf16.msra.mxu0 %v370
        %384 = vmatpush.bf16.msra.mxu0 %v369
        %385 = vmatmul.bf16.gmra.mxu0 %v321
        %v386 = vpop.f32.mrf.mxu0
        %v387 = vadd.f32 0.0, %v386
        %v388 = vpop.f32.mrf.mxu0
        %v389 = vadd.f32 0.0, %v388
        %390 = vmatmul.bf16.gmra.mxu0 %v322
        %v391 = vpop.f32.mrf.mxu0
        %v392 = vadd.f32 0.0, %v391
        %v393 = vpop.f32.mrf.mxu0
        %v394 = vadd.f32 0.0, %v393
        %395 = vmatmul.bf16.gmra.mxu0 %v323
        %v396 = vpop.f32.mrf.mxu0
        %v397 = vadd.f32 0.0, %v396
        %v398 = vpop.f32.mrf.mxu0
        %v399 = vadd.f32 0.0, %v398
        %400 = vmatmul.bf16.gmra.mxu0 %v324
        %v401 = vpop.f32.mrf.mxu0
        %v402 = vadd.f32 0.0, %v401
        %v403 = vpop.f32.mrf.mxu0
        %v404 = vadd.f32 0.0, %v403
        %405 = vmatmul.bf16.gmra.mxu0 %v325
        %v406 = vpop.f32.mrf.mxu0
        %v407 = vadd.f32 0.0, %v406
        %v408 = vpop.f32.mrf.mxu0
        %v409 = vadd.f32 0.0, %v408
        %410 = vmatmul.bf16.gmra.mxu0 %v326
        %v411 = vpop.f32.mrf.mxu0
        %v412 = vadd.f32 0.0, %v411
        %v413 = vpop.f32.mrf.mxu0
        %v414 = vadd.f32 0.0, %v413
        %415 = vmatmul.bf16.gmra.mxu0 %v327
        %v416 = vpop.f32.mrf.mxu0
        %v417 = vadd.f32 0.0, %v416
        %v418 = vpop.f32.mrf.mxu0
        %v419 = vadd.f32 0.0, %v418
        %420 = vmatmul.bf16.gmra.mxu0 %v328
        %v421 = vpop.f32.mrf.mxu0
        %v422 = vadd.f32 0.0, %v421
        %v423 = vpop.f32.mrf.mxu0
        %v424 = vadd.f32 0.0, %v423
        %425 = vdwg.mxu0
        %v426 = vld [vmem:[#allocation2] sm:$0xff]
        %v427 = vld [vmem:[#allocation2 + $0x8] sm:$0xff]
        %v428 = vld [vmem:[#allocation2 + $0x10] sm:$0xff]
        %v429 = vld [vmem:[#allocation2 + $0x18] sm:$0xff]
        %v430 = vld [vmem:[#allocation2 + $0x20] sm:$0xff]
        %v431 = vld [vmem:[#allocation2 + $0x28] sm:$0xff]
        %v432 = vld [vmem:[#allocation2 + $0x30] sm:$0xff]
        %v433 = vld [vmem:[#allocation2 + $0x38] sm:$0xff]
        %v434 = vld [vmem:[#allocation2 + $0x40] sm:$0xff]
        %v435 = vld [vmem:[#allocation2 + $0x48] sm:$0xff]
        %v436 = vld [vmem:[#allocation2 + $0x50] sm:$0xff]
        %v437 = vld [vmem:[#allocation2 + $0x58] sm:$0xff]
        %v438 = vld [vmem:[#allocation2 + $0x60] sm:$0xff]
        %v439 = vld [vmem:[#allocation2 + $0x68] sm:$0xff]
        %v440 = vld [vmem:[#allocation2 + $0x70] sm:$0xff]
        %v441 = vld [vmem:[#allocation2 + $0x78] sm:$0xff]
        %v442 = vpack.c.bf16 %v428, %v426
        %v443 = vpack.c.bf16 %v429, %v427
        %v444 = vpack.c.bf16 %v432, %v430
        %v445 = vpack.c.bf16 %v433, %v431
        %v446 = vpack.c.bf16 %v436, %v434
        %v447 = vpack.c.bf16 %v437, %v435
        %v448 = vpack.c.bf16 %v440, %v438
        %v449 = vpack.c.bf16 %v441, %v439
        %vm450 = vcmask 523264
        %v452 = vsel %vm450, %v345, 0
        %v455 = vsel %vm450, %v346, 0
        %v458 = vsel %vm450, %v347, 0
        %v461 = vsel %vm450, %v348, 0
        %v464 = vsel %vm450, %v349, 0
        %v467 = vsel %vm450, %v350, 0
        %v470 = vsel %vm450, %v351, 0
        %v473 = vsel %vm450, %v352, 0
        %475 = vmatpush.bf16.msra.mxu0 0
        %476 = vmatpush.bf16.msra.mxu0 0
        %477 = vmatpush.bf16.msra.mxu0 0
        %478 = vmatpush.bf16.msra.mxu0 0
        %479 = vmatpush.bf16.msra.mxu0 %v448
        %480 = vmatpush.bf16.msra.mxu0 %v446
        %481 = vmatpush.bf16.msra.mxu0 %v444
        %482 = vmatpush.bf16.msra.mxu0 %v442
        %483 = vmatmul.bf16.gmra.mxu0 %v452
        %v484 = vpop.f32.mrf.mxu0
        %v485 = vadd.f32 0.0, %v484
        %v486 = vpop.f32.mrf.mxu0
        %v487 = vadd.f32 0.0, %v486
        %488 = vmatmul.bf16.gmra.mxu0 %v455
        %v489 = vpop.f32.mrf.mxu0
        %v490 = vadd.f32 0.0, %v489
        %v491 = vpop.f32.mrf.mxu0
        %v492 = vadd.f32 0.0, %v491
        %493 = vmatmul.bf16.gmra.mxu0 %v458
        %v494 = vpop.f32.mrf.mxu0
        %v495 = vadd.f32 0.0, %v494
        %v496 = vpop.f32.mrf.mxu0
        %v497 = vadd.f32 0.0, %v496
        %498 = vmatmul.bf16.gmra.mxu0 %v461
        %v499 = vpop.f32.mrf.mxu0
        %v500 = vadd.f32 0.0, %v499
        %v501 = vpop.f32.mrf.mxu0
        %v502 = vadd.f32 0.0, %v501
        %503 = vmatmul.bf16.gmra.mxu0 %v464
        %v504 = vpop.f32.mrf.mxu0
        %v505 = vadd.f32 0.0, %v504
        %v506 = vpop.f32.mrf.mxu0
        %v507 = vadd.f32 0.0, %v506
        %508 = vmatmul.bf16.gmra.mxu0 %v467
        %v509 = vpop.f32.mrf.mxu0
        %v510 = vadd.f32 0.0, %v509
        %v511 = vpop.f32.mrf.mxu0
        %v512 = vadd.f32 0.0, %v511
        %513 = vmatmul.bf16.gmra.mxu0 %v470
        %v514 = vpop.f32.mrf.mxu0
        %v515 = vadd.f32 0.0, %v514
        %v516 = vpop.f32.mrf.mxu0
        %v517 = vadd.f32 0.0, %v516
        %518 = vmatmul.bf16.gmra.mxu0 %v473
        %v519 = vpop.f32.mrf.mxu0
        %v520 = vadd.f32 0.0, %v519
        %v521 = vpop.f32.mrf.mxu0
        %v522 = vadd.f32 0.0, %v521
        %523 = vdwg.mxu0
        %524 = vmatpush.bf16.msra.mxu0 0
        %525 = vmatpush.bf16.msra.mxu0 0
        %526 = vmatpush.bf16.msra.mxu0 0
        %527 = vmatpush.bf16.msra.mxu0 0
        %528 = vmatpush.bf16.msra.mxu0 %v449
        %529 = vmatpush.bf16.msra.mxu0 %v447
        %530 = vmatpush.bf16.msra.mxu0 %v445
        %531 = vmatpush.bf16.msra.mxu0 %v443
        %532 = vmatmul.bf16.gmra.mxu0 %v452
        %v533 = vpop.f32.mrf.mxu0
        %v534 = vadd.f32 0.0, %v533
        %v535 = vpop.f32.mrf.mxu0
        %v536 = vadd.f32 0.0, %v535
        %537 = vmatmul.bf16.gmra.mxu0 %v455
        %v538 = vpop.f32.mrf.mxu0
        %v539 = vadd.f32 0.0, %v538
        %v540 = vpop.f32.mrf.mxu0
        %v541 = vadd.f32 0.0, %v540
        %542 = vmatmul.bf16.gmra.mxu0 %v458
        %v543 = vpop.f32.mrf.mxu0
        %v544 = vadd.f32 0.0, %v543
        %v545 = vpop.f32.mrf.mxu0
        %v546 = vadd.f32 0.0, %v545
        %547 = vmatmul.bf16.gmra.mxu0 %v461
        %v548 = vpop.f32.mrf.mxu0
        %v549 = vadd.f32 0.0, %v548
        %v550 = vpop.f32.mrf.mxu0
        %v551 = vadd.f32 0.0, %v550
        %552 = vmatmul.bf16.gmra.mxu0 %v464
        %v553 = vpop.f32.mrf.mxu0
        %v554 = vadd.f32 0.0, %v553
        %v555 = vpop.f32.mrf.mxu0
        %v556 = vadd.f32 0.0, %v555
        %557 = vmatmul.bf16.gmra.mxu0 %v467
        %v558 = vpop.f32.mrf.mxu0
        %v559 = vadd.f32 0.0, %v558
        %v560 = vpop.f32.mrf.mxu0
        %v561 = vadd.f32 0.0, %v560
        %562 = vmatmul.bf16.gmra.mxu0 %v470
        %v563 = vpop.f32.mrf.mxu0
        %v564 = vadd.f32 0.0, %v563
        %v565 = vpop.f32.mrf.mxu0
        %v566 = vadd.f32 0.0, %v565
        %567 = vmatmul.bf16.gmra.mxu0 %v473
        %v568 = vpop.f32.mrf.mxu0
        %v569 = vadd.f32 0.0, %v568
        %v570 = vpop.f32.mrf.mxu0
        %v571 = vadd.f32 0.0, %v570
        %572 = vdwg.mxu0
        %v573 = vmul.f32 %v387, 0.17677669
        %v574 = vmul.f32 %v389, 0.17677669
        %v575 = vmul.f32 %v392, 0.17677669
        %v576 = vmul.f32 %v394, 0.17677669
        %v577 = vmul.f32 %v397, 0.17677669
        %v578 = vmul.f32 %v399, 0.17677669
        %v579 = vmul.f32 %v402, 0.17677669
        %v580 = vmul.f32 %v404, 0.17677669
        %v581 = vmul.f32 %v407, 0.17677669
        %v582 = vmul.f32 %v409, 0.17677669
        %v583 = vmul.f32 %v412, 0.17677669
        %v584 = vmul.f32 %v414, 0.17677669
        %v585 = vmul.f32 %v417, 0.17677669
        %v586 = vmul.f32 %v419, 0.17677669
        %v587 = vmul.f32 %v422, 0.17677669
        %v588 = vmul.f32 %v424, 0.17677669
        %v589 = vpack.c.bf16 %v573, %v573
        %v590 = vpack.c.bf16 %v574, %v574
        %v591 = vpack.c.bf16 %v575, %v575
        %v592 = vpack.c.bf16 %v576, %v576
        %v593 = vpack.c.bf16 %v577, %v577
        %v594 = vpack.c.bf16 %v578, %v578
        %v595 = vpack.c.bf16 %v579, %v579
        %v596 = vpack.c.bf16 %v580, %v580
        %v597 = vpack.c.bf16 %v581, %v581
        %v598 = vpack.c.bf16 %v582, %v582
        %v599 = vpack.c.bf16 %v583, %v583
        %v600 = vpack.c.bf16 %v584, %v584
        %v601 = vpack.c.bf16 %v585, %v585
        %v602 = vpack.c.bf16 %v586, %v586
        %v603 = vpack.c.bf16 %v587, %v587
        %v604 = vpack.c.bf16 %v588, %v588
        %v605 = vpack.c.bf16 %v485, %v485
        %v606 = vpack.c.bf16 %v487, %v487
        %v607 = vpack.c.bf16 %v490, %v490
        %v608 = vpack.c.bf16 %v492, %v492
        %v609 = vpack.c.bf16 %v495, %v495
        %v610 = vpack.c.bf16 %v497, %v497
        %v611 = vpack.c.bf16 %v500, %v500
        %v612 = vpack.c.bf16 %v502, %v502
        %v613 = vpack.c.bf16 %v505, %v505
        %v614 = vpack.c.bf16 %v507, %v507
        %v615 = vpack.c.bf16 %v510, %v510
        %v616 = vpack.c.bf16 %v512, %v512
        %v617 = vpack.c.bf16 %v515, %v515
        %v618 = vpack.c.bf16 %v517, %v517
        %v619 = vpack.c.bf16 %v520, %v520
        %v620 = vpack.c.bf16 %v522, %v522
        %v621 = vpack.c.bf16 %v534, %v534
        %v622 = vpack.c.bf16 %v536, %v536
        %v623 = vpack.c.bf16 %v539, %v539
        %v624 = vpack.c.bf16 %v541, %v541
        %v625 = vpack.c.bf16 %v544, %v544
        %v626 = vpack.c.bf16 %v546, %v546
        %v627 = vpack.c.bf16 %v549, %v549
        %v628 = vpack.c.bf16 %v551, %v551
        %v629 = vpack.c.bf16 %v554, %v554
        %v630 = vpack.c.bf16 %v556, %v556
        %v631 = vpack.c.bf16 %v559, %v559
        %v632 = vpack.c.bf16 %v561, %v561
        %v633 = vpack.c.bf16 %v564, %v564
        %v634 = vpack.c.bf16 %v566, %v566
        %v635 = vpack.c.bf16 %v569, %v569
        %v636 = vpack.c.bf16 %v571, %v571
        %v653 = vunpack.c.l.b16 %v589
        %v654 = vunpack.c.l.b16 %v590
        %v655 = vunpack.c.l.b16 %v591
        %v656 = vunpack.c.l.b16 %v592
        %v657 = vunpack.c.l.b16 %v593
        %v658 = vunpack.c.l.b16 %v594
        %v659 = vunpack.c.l.b16 %v595
        %v660 = vunpack.c.l.b16 %v596
        %v661 = vunpack.c.l.b16 %v597
        %v662 = vunpack.c.l.b16 %v598
        %v663 = vunpack.c.l.b16 %v599
        %v664 = vunpack.c.l.b16 %v600
        %v665 = vunpack.c.l.b16 %v601
        %v666 = vunpack.c.l.b16 %v602
        %v667 = vunpack.c.l.b16 %v603
        %v668 = vunpack.c.l.b16 %v604
        %v669 = vpack.c.b16 %v654, %v653
        %v670 = vpack.c.b16 %v656, %v655
        %v671 = vpack.c.b16 %v658, %v657
        %v672 = vpack.c.b16 %v660, %v659
        %v673 = vpack.c.b16 %v662, %v661
        %v674 = vpack.c.b16 %v664, %v663
        %v675 = vpack.c.b16 %v666, %v665
        %v676 = vpack.c.b16 %v668, %v667
        %v693 = vunpack.c.l.b16 %v605
        %v694 = vunpack.c.l.b16 %v606
        %v695 = vunpack.c.l.b16 %v607
        %v696 = vunpack.c.l.b16 %v608
        %v697 = vunpack.c.l.b16 %v609
        %v698 = vunpack.c.l.b16 %v610
        %v699 = vunpack.c.l.b16 %v611
        %v700 = vunpack.c.l.b16 %v612
        %v701 = vunpack.c.l.b16 %v613
        %v702 = vunpack.c.l.b16 %v614
        %v703 = vunpack.c.l.b16 %v615
        %v704 = vunpack.c.l.b16 %v616
        %v705 = vunpack.c.l.b16 %v617
        %v706 = vunpack.c.l.b16 %v618
        %v707 = vunpack.c.l.b16 %v619
        %v708 = vunpack.c.l.b16 %v620
        %v709 = vpack.c.b16 %v694, %v693
        %v710 = vpack.c.b16 %v696, %v695
        %v711 = vpack.c.b16 %v698, %v697
        %v712 = vpack.c.b16 %v700, %v699
        %v713 = vpack.c.b16 %v702, %v701
        %v714 = vpack.c.b16 %v704, %v703
        %v715 = vpack.c.b16 %v706, %v705
        %v716 = vpack.c.b16 %v708, %v707
        %vm717 = vcmask 261120
        %v719 = vsel %vm717, %v669, 0
        %v722 = vsel %vm717, %v670, 0
        %v725 = vsel %vm717, %v671, 0
        %v728 = vsel %vm717, %v672, 0
        %v731 = vsel %vm717, %v673, 0
        %v734 = vsel %vm717, %v674, 0
        %v737 = vsel %vm717, %v675, 0
        %v740 = vsel %vm717, %v676, 0
        %v743 = vsel %vm717, %v709, 0
        %v746 = vsel %vm717, %v710, 0
        %v749 = vsel %vm717, %v711, 0
        %v752 = vsel %vm717, %v712, 0
        %v755 = vsel %vm717, %v713, 0
        %v758 = vsel %vm717, %v714, 0
        %v761 = vsel %vm717, %v715, 0
        %v764 = vsel %vm717, %v716, 0
        %766 = vmatpush.bf16.xpose.msra.mxu0 %v764
        %767 = vmatpush.bf16.xpose.msra.mxu0 %v761
        %768 = vmatpush.bf16.xpose.msra.mxu0 %v758
        %769 = vmatpush.bf16.xpose.msra.mxu0 %v755
        %770 = vmatpush.bf16.xpose.msra.mxu0 %v752
        %771 = vmatpush.bf16.xpose.msra.mxu0 %v749
        %772 = vmatpush.bf16.xpose.msra.mxu0 %v746
        %773 = vmatpush.bf16.xpose.msra.mxu0 %v743
        %774 = vmatmul.bf16.gmra.mxu0 %v719
        %v775 = vpop.f32.mrf.mxu0
        %v776 = vadd.f32 0.0, %v775
        %v777 = vpop.f32.mrf.mxu0
        %v778 = vadd.f32 0.0, %v777
        %779 = vmatmul.bf16.gmra.mxu0 %v722
        %v780 = vpop.f32.mrf.mxu0
        %v781 = vadd.f32 0.0, %v780
        %v782 = vpop.f32.mrf.mxu0
        %v783 = vadd.f32 0.0, %v782
        %784 = vmatmul.bf16.gmra.mxu0 %v725
        %v785 = vpop.f32.mrf.mxu0
        %v786 = vadd.f32 0.0, %v785
        %v787 = vpop.f32.mrf.mxu0
        %v788 = vadd.f32 0.0, %v787
        %789 = vmatmul.bf16.gmra.mxu0 %v728
        %v790 = vpop.f32.mrf.mxu0
        %v791 = vadd.f32 0.0, %v790
        %v792 = vpop.f32.mrf.mxu0
        %v793 = vadd.f32 0.0, %v792
        %794 = vmatmul.bf16.gmra.mxu0 %v731
        %v795 = vpop.f32.mrf.mxu0
        %v796 = vadd.f32 0.0, %v795
        %v797 = vpop.f32.mrf.mxu0
        %v798 = vadd.f32 0.0, %v797
        %799 = vmatmul.bf16.gmra.mxu0 %v734
        %v800 = vpop.f32.mrf.mxu0
        %v801 = vadd.f32 0.0, %v800
        %v802 = vpop.f32.mrf.mxu0
        %v803 = vadd.f32 0.0, %v802
        %804 = vmatmul.bf16.gmra.mxu0 %v737
        %v805 = vpop.f32.mrf.mxu0
        %v806 = vadd.f32 0.0, %v805
        %v807 = vpop.f32.mrf.mxu0
        %v808 = vadd.f32 0.0, %v807
        %809 = vmatmul.bf16.gmra.mxu0 %v740
        %v810 = vpop.f32.mrf.mxu0
        %v811 = vadd.f32 0.0, %v810
        %v812 = vpop.f32.mrf.mxu0
        %v813 = vadd.f32 0.0, %v812
        %814 = vdwg.mxu0
        %815 = vmax.xlane.f32.xlu0 %v776
        %v816 = vpop.xlane.xlu0 %815
        %817 = vmax.xlane.f32.xlu0 %v778
        %v818 = vpop.xlane.xlu0 %817
        %819 = vmax.xlane.f32.xlu0 %v781
        %v820 = vpop.xlane.xlu0 %819
        %821 = vmax.xlane.f32.xlu0 %v783
        %v822 = vpop.xlane.xlu0 %821
        %823 = vmax.xlane.f32.xlu0 %v786
        %v824 = vpop.xlane.xlu0 %823
        %825 = vmax.xlane.f32.xlu0 %v788
        %v826 = vpop.xlane.xlu0 %825
        %827 = vmax.xlane.f32.xlu0 %v791
        %v828 = vpop.xlane.xlu0 %827
        %829 = vmax.xlane.f32.xlu0 %v793
        %v830 = vpop.xlane.xlu0 %829
        %831 = vmax.xlane.f32.xlu0 %v796
        %v832 = vpop.xlane.xlu0 %831
        %833 = vmax.xlane.f32.xlu0 %v798
        %v834 = vpop.xlane.xlu0 %833
        %835 = vmax.xlane.f32.xlu0 %v801
        %v836 = vpop.xlane.xlu0 %835
        %837 = vmax.xlane.f32.xlu0 %v803
        %v838 = vpop.xlane.xlu0 %837
        %839 = vmax.xlane.f32.xlu0 %v806
        %v840 = vpop.xlane.xlu0 %839
        %841 = vmax.xlane.f32.xlu0 %v808
        %v842 = vpop.xlane.xlu0 %841
        %843 = vmax.xlane.f32.xlu0 %v811
        %v844 = vpop.xlane.xlu0 %843
        %845 = vmax.xlane.f32.xlu0 %v813
        %v846 = vpop.xlane.xlu0 %845
        %v847 = vsub.f32 %v776, %v816
        %v848 = vsub.f32 %v778, %v818
        %v849 = vsub.f32 %v781, %v820
        %v850 = vsub.f32 %v783, %v822
        %v851 = vsub.f32 %v786, %v824
        %v852 = vsub.f32 %v788, %v826
        %v853 = vsub.f32 %v791, %v828
        %v854 = vsub.f32 %v793, %v830
        %v855 = vsub.f32 %v796, %v832
        %v856 = vsub.f32 %v798, %v834
        %v857 = vsub.f32 %v801, %v836
        %v858 = vsub.f32 %v803, %v838
        %v859 = vsub.f32 %v806, %v840
        %v860 = vsub.f32 %v808, %v842
        %v861 = vsub.f32 %v811, %v844
        %v862 = vsub.f32 %v813, %v846
        %v863 = vmul.f32 %v847, 1.442695
        %v864 = vpow.pop %v863
        %v865 = vmul.f32 %v848, 1.442695
        %v866 = vpow.pop %v865
        %v867 = vmul.f32 %v849, 1.442695
        %v868 = vpow.pop %v867
        %v869 = vmul.f32 %v850, 1.442695
        %v870 = vpow.pop %v869
        %v871 = vmul.f32 %v851, 1.442695
        %v872 = vpow.pop %v871
        %v873 = vmul.f32 %v852, 1.442695
        %v874 = vpow.pop %v873
        %v875 = vmul.f32 %v853, 1.442695
        %v876 = vpow.pop %v875
        %v877 = vmul.f32 %v854, 1.442695
        %v878 = vpow.pop %v877
        %v879 = vmul.f32 %v855, 1.442695
        %v880 = vpow.pop %v879
        %v881 = vmul.f32 %v856, 1.442695
        %v882 = vpow.pop %v881
        %v883 = vmul.f32 %v857, 1.442695
        %v884 = vpow.pop %v883
        %v885 = vmul.f32 %v858, 1.442695
        %v886 = vpow.pop %v885
        %v887 = vmul.f32 %v859, 1.442695
        %v888 = vpow.pop %v887
        %v889 = vmul.f32 %v860, 1.442695
        %v890 = vpow.pop %v889
        %v891 = vmul.f32 %v861, 1.442695
        %v892 = vpow.pop %v891
        %v893 = vmul.f32 %v862, 1.442695
        %v894 = vpow.pop %v893
        %895 = vadd.xlane.f32.xlu0 %v864
        %v896 = vpop.xlane.xlu0 %895
        %897 = vadd.xlane.f32.xlu0 %v866
        %v898 = vpop.xlane.xlu0 %897
        %899 = vadd.xlane.f32.xlu0 %v868
        %v900 = vpop.xlane.xlu0 %899
        %901 = vadd.xlane.f32.xlu0 %v870
        %v902 = vpop.xlane.xlu0 %901
        %903 = vadd.xlane.f32.xlu0 %v872
        %v904 = vpop.xlane.xlu0 %903
        %905 = vadd.xlane.f32.xlu0 %v874
        %v906 = vpop.xlane.xlu0 %905
        %907 = vadd.xlane.f32.xlu0 %v876
        %v908 = vpop.xlane.xlu0 %907
        %909 = vadd.xlane.f32.xlu0 %v878
        %v910 = vpop.xlane.xlu0 %909
        %911 = vadd.xlane.f32.xlu0 %v880
        %v912 = vpop.xlane.xlu0 %911
        %913 = vadd.xlane.f32.xlu0 %v882
        %v914 = vpop.xlane.xlu0 %913
        %915 = vadd.xlane.f32.xlu0 %v884
        %v916 = vpop.xlane.xlu0 %915
        %917 = vadd.xlane.f32.xlu0 %v886
        %v918 = vpop.xlane.xlu0 %917
        %919 = vadd.xlane.f32.xlu0 %v888
        %v920 = vpop.xlane.xlu0 %919
        %921 = vadd.xlane.f32.xlu0 %v890
        %v922 = vpop.xlane.xlu0 %921
        %923 = vadd.xlane.f32.xlu0 %v892
        %v924 = vpop.xlane.xlu0 %923
        %925 = vadd.xlane.f32.xlu0 %v894
        %v926 = vpop.xlane.xlu0 %925
        %v927 = vpack.c.bf16 %v864, %v864
        %v928 = vpack.c.bf16 %v866, %v866
        %v929 = vpack.c.bf16 %v868, %v868
        %v930 = vpack.c.bf16 %v870, %v870
        %v931 = vpack.c.bf16 %v872, %v872
        %v932 = vpack.c.bf16 %v874, %v874
        %v933 = vpack.c.bf16 %v876, %v876
        %v934 = vpack.c.bf16 %v878, %v878
        %v935 = vpack.c.bf16 %v880, %v880
        %v936 = vpack.c.bf16 %v882, %v882
        %v937 = vpack.c.bf16 %v884, %v884
        %v938 = vpack.c.bf16 %v886, %v886
        %v939 = vpack.c.bf16 %v888, %v888
        %v940 = vpack.c.bf16 %v890, %v890
        %v941 = vpack.c.bf16 %v892, %v892
        %v942 = vpack.c.bf16 %v894, %v894
        %v959 = vunpack.c.l.b16 %v927
        %v960 = vunpack.c.l.b16 %v928
        %v961 = vunpack.c.l.b16 %v929
        %v962 = vunpack.c.l.b16 %v930
        %v963 = vunpack.c.l.b16 %v931
        %v964 = vunpack.c.l.b16 %v932
        %v965 = vunpack.c.l.b16 %v933
        %v966 = vunpack.c.l.b16 %v934
        %v967 = vunpack.c.l.b16 %v935
        %v968 = vunpack.c.l.b16 %v936
        %v969 = vunpack.c.l.b16 %v937
        %v970 = vunpack.c.l.b16 %v938
        %v971 = vunpack.c.l.b16 %v939
        %v972 = vunpack.c.l.b16 %v940
        %v973 = vunpack.c.l.b16 %v941
        %v974 = vunpack.c.l.b16 %v942
        %v975 = vpack.c.b16 %v960, %v959
        %v976 = vpack.c.b16 %v962, %v961
        %v977 = vpack.c.b16 %v964, %v963
        %v978 = vpack.c.b16 %v966, %v965
        %v979 = vpack.c.b16 %v968, %v967
        %v980 = vpack.c.b16 %v970, %v969
        %v981 = vpack.c.b16 %v972, %v971
        %v982 = vpack.c.b16 %v974, %v973
        %v1007 = vunpack.c.l.b16 %v621
        %v1008 = vunpack.c.l.b16 %v622
        %v1009 = vunpack.c.l.b16 %v623
        %v1010 = vunpack.c.l.b16 %v624
        %v1011 = vunpack.c.l.b16 %v625
        %v1012 = vunpack.c.l.b16 %v626
        %v1013 = vunpack.c.l.b16 %v627
        %v1014 = vunpack.c.l.b16 %v628
        %v1015 = vunpack.c.l.b16 %v629
        %v1016 = vunpack.c.l.b16 %v630
        %v1017 = vunpack.c.l.b16 %v631
        %v1018 = vunpack.c.l.b16 %v632
        %v1019 = vunpack.c.l.b16 %v633
        %v1020 = vunpack.c.l.b16 %v634
        %v1021 = vunpack.c.l.b16 %v635
        %v1022 = vunpack.c.l.b16 %v636
        %v1023 = vpack.c.b16 %v1008, %v1007
        %v1024 = vpack.c.b16 %v1010, %v1009
        %v1025 = vpack.c.b16 %v1012, %v1011
        %v1026 = vpack.c.b16 %v1014, %v1013
        %v1027 = vpack.c.b16 %v1016, %v1015
        %v1028 = vpack.c.b16 %v1018, %v1017
        %v1029 = vpack.c.b16 %v1020, %v1019
        %v1030 = vpack.c.b16 %v1022, %v1021
        %1039 = vmatpush.bf16.msra.mxu0 %v1030
        %1040 = vmatpush.bf16.msra.mxu0 %v1029
        %1041 = vmatpush.bf16.msra.mxu0 %v1028
        %1042 = vmatpush.bf16.msra.mxu0 %v1027
        %1043 = vmatpush.bf16.msra.mxu0 %v1026
        %1044 = vmatpush.bf16.msra.mxu0 %v1025
        %1045 = vmatpush.bf16.msra.mxu0 %v1024
        %1046 = vmatpush.bf16.msra.mxu0 %v1023
        %1047 = vmatmul.bf16.gmra.mxu0 %v975
        %v1048 = vpop.f32.mrf.mxu0
        %v1049 = vadd.f32 0.0, %v1048
        %v1050 = vpop.f32.mrf.mxu0
        %v1051 = vadd.f32 0.0, %v1050
        %1052 = vmatmul.bf16.gmra.mxu0 %v976
        %v1053 = vpop.f32.mrf.mxu0
        %v1054 = vadd.f32 0.0, %v1053
        %v1055 = vpop.f32.mrf.mxu0
        %v1056 = vadd.f32 0.0, %v1055
        %1057 = vmatmul.bf16.gmra.mxu0 %v977
        %v1058 = vpop.f32.mrf.mxu0
        %v1059 = vadd.f32 0.0, %v1058
        %v1060 = vpop.f32.mrf.mxu0
        %v1061 = vadd.f32 0.0, %v1060
        %1062 = vmatmul.bf16.gmra.mxu0 %v978
        %v1063 = vpop.f32.mrf.mxu0
        %v1064 = vadd.f32 0.0, %v1063
        %v1065 = vpop.f32.mrf.mxu0
        %v1066 = vadd.f32 0.0, %v1065
        %1067 = vmatmul.bf16.gmra.mxu0 %v979
        %v1068 = vpop.f32.mrf.mxu0
        %v1069 = vadd.f32 0.0, %v1068
        %v1070 = vpop.f32.mrf.mxu0
        %v1071 = vadd.f32 0.0, %v1070
        %1072 = vmatmul.bf16.gmra.mxu0 %v980
        %v1073 = vpop.f32.mrf.mxu0
        %v1074 = vadd.f32 0.0, %v1073
        %v1075 = vpop.f32.mrf.mxu0
        %v1076 = vadd.f32 0.0, %v1075
        %1077 = vmatmul.bf16.gmra.mxu0 %v981
        %v1078 = vpop.f32.mrf.mxu0
        %v1079 = vadd.f32 0.0, %v1078
        %v1080 = vpop.f32.mrf.mxu0
        %v1081 = vadd.f32 0.0, %v1080
        %1082 = vmatmul.bf16.gmra.mxu0 %v982
        %v1083 = vpop.f32.mrf.mxu0
        %v1084 = vadd.f32 0.0, %v1083
        %v1085 = vpop.f32.mrf.mxu0
        %v1086 = vadd.f32 0.0, %v1085
        %1087 = vdwg.mxu0
        %v1088 = vrcp.pop %v896
        %v1089 = vrcp.pop %v898
        %v1090 = vrcp.pop %v900
        %v1091 = vrcp.pop %v902
        %v1092 = vrcp.pop %v904
        %v1093 = vrcp.pop %v906
        %v1094 = vrcp.pop %v908
        %v1095 = vrcp.pop %v910
        %v1096 = vrcp.pop %v912
        %v1097 = vrcp.pop %v914
        %v1098 = vrcp.pop %v916
        %v1099 = vrcp.pop %v918
        %v1100 = vrcp.pop %v920
        %v1101 = vrcp.pop %v922
        %v1102 = vrcp.pop %v924
        %v1103 = vrcp.pop %v926
        %v1104 = vmul.f32 %v1049, %v1088
        %v1105 = vmul.f32 %v1051, %v1089
        %v1106 = vmul.f32 %v1054, %v1090
        %v1107 = vmul.f32 %v1056, %v1091
        %v1108 = vmul.f32 %v1059, %v1092
        %v1109 = vmul.f32 %v1061, %v1093
        %v1110 = vmul.f32 %v1064, %v1094
        %v1111 = vmul.f32 %v1066, %v1095
        %v1112 = vmul.f32 %v1069, %v1096
        %v1113 = vmul.f32 %v1071, %v1097
        %v1114 = vmul.f32 %v1074, %v1098
        %v1115 = vmul.f32 %v1076, %v1099
        %v1116 = vmul.f32 %v1079, %v1100
        %v1117 = vmul.f32 %v1081, %v1101
        %v1118 = vmul.f32 %v1084, %v1102
        %v1119 = vmul.f32 %v1086, %v1103
        %1120 = vrot.lane.b32.xlu0 %v669, 96
        %v1121 = vpop.permute.xlu0 %1120
        %1122 = vrot.lane.b32.xlu0 %v670, 96
        %v1123 = vpop.permute.xlu0 %1122
        %1124 = vrot.lane.b32.xlu0 %v671, 96
        %v1125 = vpop.permute.xlu0 %1124
        %1126 = vrot.lane.b32.xlu0 %v672, 96
        %v1127 = vpop.permute.xlu0 %1126
        %1128 = vrot.lane.b32.xlu0 %v673, 96
        %v1129 = vpop.permute.xlu0 %1128
        %1130 = vrot.lane.b32.xlu0 %v674, 96
        %v1131 = vpop.permute.xlu0 %1130
        %1132 = vrot.lane.b32.xlu0 %v675, 96
        %v1133 = vpop.permute.xlu0 %1132
        %1134 = vrot.lane.b32.xlu0 %v676, 96
        %v1135 = vpop.permute.xlu0 %1134
        %1136 = vrot.lane.b32.xlu0 %v709, 96
        %v1137 = vpop.permute.xlu0 %1136
        %1138 = vrot.lane.b32.xlu0 %v710, 96
        %v1139 = vpop.permute.xlu0 %1138
        %1140 = vrot.lane.b32.xlu0 %v711, 96
        %v1141 = vpop.permute.xlu0 %1140
        %1142 = vrot.lane.b32.xlu0 %v712, 96
        %v1143 = vpop.permute.xlu0 %1142
        %1144 = vrot.lane.b32.xlu0 %v713, 96
        %v1145 = vpop.permute.xlu0 %1144
        %1146 = vrot.lane.b32.xlu0 %v714, 96
        %v1147 = vpop.permute.xlu0 %1146
        %1148 = vrot.lane.b32.xlu0 %v715, 96
        %v1149 = vpop.permute.xlu0 %1148
        %1150 = vrot.lane.b32.xlu0 %v716, 96
        %v1151 = vpop.permute.xlu0 %1150
        %v1153 = vsel %vm717, %v1121, 0
        %v1156 = vsel %vm717, %v1123, 0
        %v1159 = vsel %vm717, %v1125, 0
        %v1162 = vsel %vm717, %v1127, 0
        %v1165 = vsel %vm717, %v1129, 0
        %v1168 = vsel %vm717, %v1131, 0
        %v1171 = vsel %vm717, %v1133, 0
        %v1174 = vsel %vm717, %v1135, 0
        %v1177 = vsel %vm717, %v1137, 0
        %v1180 = vsel %vm717, %v1139, 0
        %v1183 = vsel %vm717, %v1141, 0
        %v1186 = vsel %vm717, %v1143, 0
        %v1189 = vsel %vm717, %v1145, 0
        %v1192 = vsel %vm717, %v1147, 0
        %v1195 = vsel %vm717, %v1149, 0
        %v1198 = vsel %vm717, %v1151, 0
        %1200 = vmatpush.bf16.xpose.msra.mxu0 %v1198
        %1201 = vmatpush.bf16.xpose.msra.mxu0 %v1195
        %1202 = vmatpush.bf16.xpose.msra.mxu0 %v1192
        %1203 = vmatpush.bf16.xpose.msra.mxu0 %v1189
        %1204 = vmatpush.bf16.xpose.msra.mxu0 %v1186
        %1205 = vmatpush.bf16.xpose.msra.mxu0 %v1183
        %1206 = vmatpush.bf16.xpose.msra.mxu0 %v1180
        %1207 = vmatpush.bf16.xpose.msra.mxu0 %v1177
        %1208 = vmatmul.bf16.gmra.mxu0 %v1153
        %v1209 = vpop.f32.mrf.mxu0
        %v1210 = vadd.f32 0.0, %v1209
        %v1211 = vpop.f32.mrf.mxu0
        %v1212 = vadd.f32 0.0, %v1211
        %1213 = vmatmul.bf16.gmra.mxu0 %v1156
        %v1214 = vpop.f32.mrf.mxu0
        %v1215 = vadd.f32 0.0, %v1214
        %v1216 = vpop.f32.mrf.mxu0
        %v1217 = vadd.f32 0.0, %v1216
        %1218 = vmatmul.bf16.gmra.mxu0 %v1159
        %v1219 = vpop.f32.mrf.mxu0
        %v1220 = vadd.f32 0.0, %v1219
        %v1221 = vpop.f32.mrf.mxu0
        %v1222 = vadd.f32 0.0, %v1221
        %1223 = vmatmul.bf16.gmra.mxu0 %v1162
        %v1224 = vpop.f32.mrf.mxu0
        %v1225 = vadd.f32 0.0, %v1224
        %v1226 = vpop.f32.mrf.mxu0
        %v1227 = vadd.f32 0.0, %v1226
        %1228 = vmatmul.bf16.gmra.mxu0 %v1165
        %v1229 = vpop.f32.mrf.mxu0
        %v1230 = vadd.f32 0.0, %v1229
        %v1231 = vpop.f32.mrf.mxu0
        %v1232 = vadd.f32 0.0, %v1231
        %1233 = vmatmul.bf16.gmra.mxu0 %v1168
        %v1234 = vpop.f32.mrf.mxu0
        %v1235 = vadd.f32 0.0, %v1234
        %v1236 = vpop.f32.mrf.mxu0
        %v1237 = vadd.f32 0.0, %v1236
        %1238 = vmatmul.bf16.gmra.mxu0 %v1171
        %v1239 = vpop.f32.mrf.mxu0
        %v1240 = vadd.f32 0.0, %v1239
        %v1241 = vpop.f32.mrf.mxu0
        %v1242 = vadd.f32 0.0, %v1241
        %1243 = vmatmul.bf16.gmra.mxu0 %v1174
        %v1244 = vpop.f32.mrf.mxu0
        %v1245 = vadd.f32 0.0, %v1244
        %v1246 = vpop.f32.mrf.mxu0
        %v1247 = vadd.f32 0.0, %v1246
        %1248 = vdwg.mxu0
        %1249 = vmax.xlane.f32.xlu0 %v1210
        %v1250 = vpop.xlane.xlu0 %1249
        %1251 = vmax.xlane.f32.xlu0 %v1212
        %v1252 = vpop.xlane.xlu0 %1251
        %1253 = vmax.xlane.f32.xlu0 %v1215
        %v1254 = vpop.xlane.xlu0 %1253
        %1255 = vmax.xlane.f32.xlu0 %v1217
        %v1256 = vpop.xlane.xlu0 %1255
        %1257 = vmax.xlane.f32.xlu0 %v1220
        %v1258 = vpop.xlane.xlu0 %1257
        %1259 = vmax.xlane.f32.xlu0 %v1222
        %v1260 = vpop.xlane.xlu0 %1259
        %1261 = vmax.xlane.f32.xlu0 %v1225
        %v1262 = vpop.xlane.xlu0 %1261
        %1263 = vmax.xlane.f32.xlu0 %v1227
        %v1264 = vpop.xlane.xlu0 %1263
        %1265 = vmax.xlane.f32.xlu0 %v1230
        %v1266 = vpop.xlane.xlu0 %1265
        %1267 = vmax.xlane.f32.xlu0 %v1232
        %v1268 = vpop.xlane.xlu0 %1267
        %1269 = vmax.xlane.f32.xlu0 %v1235
        %v1270 = vpop.xlane.xlu0 %1269
        %1271 = vmax.xlane.f32.xlu0 %v1237
        %v1272 = vpop.xlane.xlu0 %1271
        %1273 = vmax.xlane.f32.xlu0 %v1240
        %v1274 = vpop.xlane.xlu0 %1273
        %1275 = vmax.xlane.f32.xlu0 %v1242
        %v1276 = vpop.xlane.xlu0 %1275
        %1277 = vmax.xlane.f32.xlu0 %v1245
        %v1278 = vpop.xlane.xlu0 %1277
        %1279 = vmax.xlane.f32.xlu0 %v1247
        %v1280 = vpop.xlane.xlu0 %1279
        %v1281 = vsub.f32 %v1210, %v1250
        %v1282 = vsub.f32 %v1212, %v1252
        %v1283 = vsub.f32 %v1215, %v1254
        %v1284 = vsub.f32 %v1217, %v1256
        %v1285 = vsub.f32 %v1220, %v1258
        %v1286 = vsub.f32 %v1222, %v1260
        %v1287 = vsub.f32 %v1225, %v1262
        %v1288 = vsub.f32 %v1227, %v1264
        %v1289 = vsub.f32 %v1230, %v1266
        %v1290 = vsub.f32 %v1232, %v1268
        %v1291 = vsub.f32 %v1235, %v1270
        %v1292 = vsub.f32 %v1237, %v1272
        %v1293 = vsub.f32 %v1240, %v1274
        %v1294 = vsub.f32 %v1242, %v1276
        %v1295 = vsub.f32 %v1245, %v1278
        %v1296 = vsub.f32 %v1247, %v1280
        %v1297 = vmul.f32 %v1281, 1.442695
        %v1298 = vpow.pop %v1297
        %v1299 = vmul.f32 %v1282, 1.442695
        %v1300 = vpow.pop %v1299
        %v1301 = vmul.f32 %v1283, 1.442695
        %v1302 = vpow.pop %v1301
        %v1303 = vmul.f32 %v1284, 1.442695
        %v1304 = vpow.pop %v1303
        %v1305 = vmul.f32 %v1285, 1.442695
        %v1306 = vpow.pop %v1305
        %v1307 = vmul.f32 %v1286, 1.442695
        %v1308 = vpow.pop %v1307
        %v1309 = vmul.f32 %v1287, 1.442695
        %v1310 = vpow.pop %v1309
        %v1311 = vmul.f32 %v1288, 1.442695
        %v1312 = vpow.pop %v1311
        %v1313 = vmul.f32 %v1289, 1.442695
        %v1314 = vpow.pop %v1313
        %v1315 = vmul.f32 %v1290, 1.442695
        %v1316 = vpow.pop %v1315
        %v1317 = vmul.f32 %v1291, 1.442695
        %v1318 = vpow.pop %v1317
        %v1319 = vmul.f32 %v1292, 1.442695
        %v1320 = vpow.pop %v1319
        %v1321 = vmul.f32 %v1293, 1.442695
        %v1322 = vpow.pop %v1321
        %v1323 = vmul.f32 %v1294, 1.442695
        %v1324 = vpow.pop %v1323
        %v1325 = vmul.f32 %v1295, 1.442695
        %v1326 = vpow.pop %v1325
        %v1327 = vmul.f32 %v1296, 1.442695
        %v1328 = vpow.pop %v1327
        %1329 = vadd.xlane.f32.xlu0 %v1298
        %v1330 = vpop.xlane.xlu0 %1329
        %1331 = vadd.xlane.f32.xlu0 %v1300
        %v1332 = vpop.xlane.xlu0 %1331
        %1333 = vadd.xlane.f32.xlu0 %v1302
        %v1334 = vpop.xlane.xlu0 %1333
        %1335 = vadd.xlane.f32.xlu0 %v1304
        %v1336 = vpop.xlane.xlu0 %1335
        %1337 = vadd.xlane.f32.xlu0 %v1306
        %v1338 = vpop.xlane.xlu0 %1337
        %1339 = vadd.xlane.f32.xlu0 %v1308
        %v1340 = vpop.xlane.xlu0 %1339
        %1341 = vadd.xlane.f32.xlu0 %v1310
        %v1342 = vpop.xlane.xlu0 %1341
        %1343 = vadd.xlane.f32.xlu0 %v1312
        %v1344 = vpop.xlane.xlu0 %1343
        %1345 = vadd.xlane.f32.xlu0 %v1314
        %v1346 = vpop.xlane.xlu0 %1345
        %1347 = vadd.xlane.f32.xlu0 %v1316
        %v1348 = vpop.xlane.xlu0 %1347
        %1349 = vadd.xlane.f32.xlu0 %v1318
        %v1350 = vpop.xlane.xlu0 %1349
        %1351 = vadd.xlane.f32.xlu0 %v1320
        %v1352 = vpop.xlane.xlu0 %1351
        %1353 = vadd.xlane.f32.xlu0 %v1322
        %v1354 = vpop.xlane.xlu0 %1353
        %1355 = vadd.xlane.f32.xlu0 %v1324
        %v1356 = vpop.xlane.xlu0 %1355
        %1357 = vadd.xlane.f32.xlu0 %v1326
        %v1358 = vpop.xlane.xlu0 %1357
        %1359 = vadd.xlane.f32.xlu0 %v1328
        %v1360 = vpop.xlane.xlu0 %1359
        %v1361 = vpack.c.bf16 %v1298, %v1298
        %v1362 = vpack.c.bf16 %v1300, %v1300
        %v1363 = vpack.c.bf16 %v1302, %v1302
        %v1364 = vpack.c.bf16 %v1304, %v1304
        %v1365 = vpack.c.bf16 %v1306, %v1306
        %v1366 = vpack.c.bf16 %v1308, %v1308
        %v1367 = vpack.c.bf16 %v1310, %v1310
        %v1368 = vpack.c.bf16 %v1312, %v1312
        %v1369 = vpack.c.bf16 %v1314, %v1314
        %v1370 = vpack.c.bf16 %v1316, %v1316
        %v1371 = vpack.c.bf16 %v1318, %v1318
        %v1372 = vpack.c.bf16 %v1320, %v1320
        %v1373 = vpack.c.bf16 %v1322, %v1322
        %v1374 = vpack.c.bf16 %v1324, %v1324
        %v1375 = vpack.c.bf16 %v1326, %v1326
        %v1376 = vpack.c.bf16 %v1328, %v1328
        %v1393 = vunpack.c.l.b16 %v1361
        %v1394 = vunpack.c.l.b16 %v1362
        %v1395 = vunpack.c.l.b16 %v1363
        %v1396 = vunpack.c.l.b16 %v1364
        %v1397 = vunpack.c.l.b16 %v1365
        %v1398 = vunpack.c.l.b16 %v1366
        %v1399 = vunpack.c.l.b16 %v1367
        %v1400 = vunpack.c.l.b16 %v1368
        %v1401 = vunpack.c.l.b16 %v1369
        %v1402 = vunpack.c.l.b16 %v1370
        %v1403 = vunpack.c.l.b16 %v1371
        %v1404 = vunpack.c.l.b16 %v1372
        %v1405 = vunpack.c.l.b16 %v1373
        %v1406 = vunpack.c.l.b16 %v1374
        %v1407 = vunpack.c.l.b16 %v1375
        %v1408 = vunpack.c.l.b16 %v1376
        %v1409 = vpack.c.b16 %v1394, %v1393
        %v1410 = vpack.c.b16 %v1396, %v1395
        %v1411 = vpack.c.b16 %v1398, %v1397
        %v1412 = vpack.c.b16 %v1400, %v1399
        %v1413 = vpack.c.b16 %v1402, %v1401
        %v1414 = vpack.c.b16 %v1404, %v1403
        %v1415 = vpack.c.b16 %v1406, %v1405
        %v1416 = vpack.c.b16 %v1408, %v1407
        %1425 = vrot.lane.b32.xlu0 %v1023, 96
        %v1426 = vpop.permute.xlu0 %1425
        %1427 = vrot.lane.b32.xlu0 %v1024, 96
        %v1428 = vpop.permute.xlu0 %1427
        %1429 = vrot.lane.b32.xlu0 %v1025, 96
        %v1430 = vpop.permute.xlu0 %1429
        %1431 = vrot.lane.b32.xlu0 %v1026, 96
        %v1432 = vpop.permute.xlu0 %1431
        %1433 = vrot.lane.b32.xlu0 %v1027, 96
        %v1434 = vpop.permute.xlu0 %1433
        %1435 = vrot.lane.b32.xlu0 %v1028, 96
        %v1436 = vpop.permute.xlu0 %1435
        %1437 = vrot.lane.b32.xlu0 %v1029, 96
        %v1438 = vpop.permute.xlu0 %1437
        %1439 = vrot.lane.b32.xlu0 %v1030, 96
        %v1440 = vpop.permute.xlu0 %1439
        %1449 = vmatpush.bf16.msra.mxu0 %v1440
        %1450 = vmatpush.bf16.msra.mxu0 %v1438
        %1451 = vmatpush.bf16.msra.mxu0 %v1436
        %1452 = vmatpush.bf16.msra.mxu0 %v1434
        %1453 = vmatpush.bf16.msra.mxu0 %v1432
        %1454 = vmatpush.bf16.msra.mxu0 %v1430
        %1455 = vmatpush.bf16.msra.mxu0 %v1428
        %1456 = vmatpush.bf16.msra.mxu0 %v1426
        %1457 = vmatmul.bf16.gmra.mxu0 %v1409
        %v1458 = vpop.f32.mrf.mxu0
        %v1459 = vadd.f32 0.0, %v1458
        %v1460 = vpop.f32.mrf.mxu0
        %v1461 = vadd.f32 0.0, %v1460
        %1462 = vmatmul.bf16.gmra.mxu0 %v1410
        %v1463 = vpop.f32.mrf.mxu0
        %v1464 = vadd.f32 0.0, %v1463
        %v1465 = vpop.f32.mrf.mxu0
        %v1466 = vadd.f32 0.0, %v1465
        %1467 = vmatmul.bf16.gmra.mxu0 %v1411
        %v1468 = vpop.f32.mrf.mxu0
        %v1469 = vadd.f32 0.0, %v1468
        %v1470 = vpop.f32.mrf.mxu0
        %v1471 = vadd.f32 0.0, %v1470
        %1472 = vmatmul.bf16.gmra.mxu0 %v1412
        %v1473 = vpop.f32.mrf.mxu0
        %v1474 = vadd.f32 0.0, %v1473
        %v1475 = vpop.f32.mrf.mxu0
        %v1476 = vadd.f32 0.0, %v1475
        %1477 = vmatmul.bf16.gmra.mxu0 %v1413
        %v1478 = vpop.f32.mrf.mxu0
        %v1479 = vadd.f32 0.0, %v1478
        %v1480 = vpop.f32.mrf.mxu0
        %v1481 = vadd.f32 0.0, %v1480
        %1482 = vmatmul.bf16.gmra.mxu0 %v1414
        %v1483 = vpop.f32.mrf.mxu0
        %v1484 = vadd.f32 0.0, %v1483
        %v1485 = vpop.f32.mrf.mxu0
        %v1486 = vadd.f32 0.0, %v1485
        %1487 = vmatmul.bf16.gmra.mxu0 %v1415
        %v1488 = vpop.f32.mrf.mxu0
        %v1489 = vadd.f32 0.0, %v1488
        %v1490 = vpop.f32.mrf.mxu0
        %v1491 = vadd.f32 0.0, %v1490
        %1492 = vmatmul.bf16.gmra.mxu0 %v1416
        %v1493 = vpop.f32.mrf.mxu0
        %v1494 = vadd.f32 0.0, %v1493
        %v1495 = vpop.f32.mrf.mxu0
        %v1496 = vadd.f32 0.0, %v1495
        %1497 = vdwg.mxu0
        %v1498 = vrcp.pop %v1330
        %v1499 = vrcp.pop %v1332
        %v1500 = vrcp.pop %v1334
        %v1501 = vrcp.pop %v1336
        %v1502 = vrcp.pop %v1338
        %v1503 = vrcp.pop %v1340
        %v1504 = vrcp.pop %v1342
        %v1505 = vrcp.pop %v1344
        %v1506 = vrcp.pop %v1346
        %v1507 = vrcp.pop %v1348
        %v1508 = vrcp.pop %v1350
        %v1509 = vrcp.pop %v1352
        %v1510 = vrcp.pop %v1354
        %v1511 = vrcp.pop %v1356
        %v1512 = vrcp.pop %v1358
        %v1513 = vrcp.pop %v1360
        %v1514 = vmul.f32 %v1459, %v1498
        %v1515 = vmul.f32 %v1461, %v1499
        %v1516 = vmul.f32 %v1464, %v1500
        %v1517 = vmul.f32 %v1466, %v1501
        %v1518 = vmul.f32 %v1469, %v1502
        %v1519 = vmul.f32 %v1471, %v1503
        %v1520 = vmul.f32 %v1474, %v1504
        %v1521 = vmul.f32 %v1476, %v1505
        %v1522 = vmul.f32 %v1479, %v1506
        %v1523 = vmul.f32 %v1481, %v1507
        %v1524 = vmul.f32 %v1484, %v1508
        %v1525 = vmul.f32 %v1486, %v1509
        %v1526 = vmul.f32 %v1489, %v1510
        %v1527 = vmul.f32 %v1491, %v1511
        %v1528 = vmul.f32 %v1494, %v1512
        %v1529 = vmul.f32 %v1496, %v1513
        %1530 = vrot.lane.b32.xlu0 %v669, 64
        %v1531 = vpop.permute.xlu0 %1530
        %1532 = vrot.lane.b32.xlu0 %v670, 64
        %v1533 = vpop.permute.xlu0 %1532
        %1534 = vrot.lane.b32.xlu0 %v671, 64
        %v1535 = vpop.permute.xlu0 %1534
        %1536 = vrot.lane.b32.xlu0 %v672, 64
        %v1537 = vpop.permute.xlu0 %1536
        %1538 = vrot.lane.b32.xlu0 %v673, 64
        %v1539 = vpop.permute.xlu0 %1538
        %1540 = vrot.lane.b32.xlu0 %v674, 64
        %v1541 = vpop.permute.xlu0 %1540
        %1542 = vrot.lane.b32.xlu0 %v675, 64
        %v1543 = vpop.permute.xlu0 %1542
        %1544 = vrot.lane.b32.xlu0 %v676, 64
        %v1545 = vpop.permute.xlu0 %1544
        %1546 = vrot.lane.b32.xlu0 %v709, 64
        %v1547 = vpop.permute.xlu0 %1546
        %1548 = vrot.lane.b32.xlu0 %v710, 64
        %v1549 = vpop.permute.xlu0 %1548
        %1550 = vrot.lane.b32.xlu0 %v711, 64
        %v1551 = vpop.permute.xlu0 %1550
        %1552 = vrot.lane.b32.xlu0 %v712, 64
        %v1553 = vpop.permute.xlu0 %1552
        %1554 = vrot.lane.b32.xlu0 %v713, 64
        %v1555 = vpop.permute.xlu0 %1554
        %1556 = vrot.lane.b32.xlu0 %v714, 64
        %v1557 = vpop.permute.xlu0 %1556
        %1558 = vrot.lane.b32.xlu0 %v715, 64
        %v1559 = vpop.permute.xlu0 %1558
        %1560 = vrot.lane.b32.xlu0 %v716, 64
        %v1561 = vpop.permute.xlu0 %1560
        %v1563 = vsel %vm717, %v1531, 0
        %v1566 = vsel %vm717, %v1533, 0
        %v1569 = vsel %vm717, %v1535, 0
        %v1572 = vsel %vm717, %v1537, 0
        %v1575 = vsel %vm717, %v1539, 0
        %v1578 = vsel %vm717, %v1541, 0
        %v1581 = vsel %vm717, %v1543, 0
        %v1584 = vsel %vm717, %v1545, 0
        %v1587 = vsel %vm717, %v1547, 0
        %v1590 = vsel %vm717, %v1549, 0
        %v1593 = vsel %vm717, %v1551, 0
        %v1596 = vsel %vm717, %v1553, 0
        %v1599 = vsel %vm717, %v1555, 0
        %v1602 = vsel %vm717, %v1557, 0
        %v1605 = vsel %vm717, %v1559, 0
        %v1608 = vsel %vm717, %v1561, 0
        %1610 = vmatpush.bf16.xpose.msra.mxu0 %v1608
        %1611 = vmatpush.bf16.xpose.msra.mxu0 %v1605
        %1612 = vmatpush.bf16.xpose.msra.mxu0 %v1602
        %1613 = vmatpush.bf16.xpose.msra.mxu0 %v1599
        %1614 = vmatpush.bf16.xpose.msra.mxu0 %v1596
        %1615 = vmatpush.bf16.xpose.msra.mxu0 %v1593
        %1616 = vmatpush.bf16.xpose.msra.mxu0 %v1590
        %1617 = vmatpush.bf16.xpose.msra.mxu0 %v1587
        %1618 = vmatmul.bf16.gmra.mxu0 %v1563
        %v1619 = vpop.f32.mrf.mxu0
        %v1620 = vadd.f32 0.0, %v1619
        %v1621 = vpop.f32.mrf.mxu0
        %v1622 = vadd.f32 0.0, %v1621
        %1623 = vmatmul.bf16.gmra.mxu0 %v1566
        %v1624 = vpop.f32.mrf.mxu0
        %v1625 = vadd.f32 0.0, %v1624
        %v1626 = vpop.f32.mrf.mxu0
        %v1627 = vadd.f32 0.0, %v1626
        %1628 = vmatmul.bf16.gmra.mxu0 %v1569
        %v1629 = vpop.f32.mrf.mxu0
        %v1630 = vadd.f32 0.0, %v1629
        %v1631 = vpop.f32.mrf.mxu0
        %v1632 = vadd.f32 0.0, %v1631
        %1633 = vmatmul.bf16.gmra.mxu0 %v1572
        %v1634 = vpop.f32.mrf.mxu0
        %v1635 = vadd.f32 0.0, %v1634
        %v1636 = vpop.f32.mrf.mxu0
        %v1637 = vadd.f32 0.0, %v1636
        %1638 = vmatmul.bf16.gmra.mxu0 %v1575
        %v1639 = vpop.f32.mrf.mxu0
        %v1640 = vadd.f32 0.0, %v1639
        %v1641 = vpop.f32.mrf.mxu0
        %v1642 = vadd.f32 0.0, %v1641
        %1643 = vmatmul.bf16.gmra.mxu0 %v1578
        %v1644 = vpop.f32.mrf.mxu0
        %v1645 = vadd.f32 0.0, %v1644
        %v1646 = vpop.f32.mrf.mxu0
        %v1647 = vadd.f32 0.0, %v1646
        %1648 = vmatmul.bf16.gmra.mxu0 %v1581
        %v1649 = vpop.f32.mrf.mxu0
        %v1650 = vadd.f32 0.0, %v1649
        %v1651 = vpop.f32.mrf.mxu0
        %v1652 = vadd.f32 0.0, %v1651
        %1653 = vmatmul.bf16.gmra.mxu0 %v1584
        %v1654 = vpop.f32.mrf.mxu0
        %v1655 = vadd.f32 0.0, %v1654
        %v1656 = vpop.f32.mrf.mxu0
        %v1657 = vadd.f32 0.0, %v1656
        %1658 = vdwg.mxu0
        %1659 = vmax.xlane.f32.xlu0 %v1620
        %v1660 = vpop.xlane.xlu0 %1659
        %1661 = vmax.xlane.f32.xlu0 %v1622
        %v1662 = vpop.xlane.xlu0 %1661
        %1663 = vmax.xlane.f32.xlu0 %v1625
        %v1664 = vpop.xlane.xlu0 %1663
        %1665 = vmax.xlane.f32.xlu0 %v1627
        %v1666 = vpop.xlane.xlu0 %1665
        %1667 = vmax.xlane.f32.xlu0 %v1630
        %v1668 = vpop.xlane.xlu0 %1667
        %1669 = vmax.xlane.f32.xlu0 %v1632
        %v1670 = vpop.xlane.xlu0 %1669
        %1671 = vmax.xlane.f32.xlu0 %v1635
        %v1672 = vpop.xlane.xlu0 %1671
        %1673 = vmax.xlane.f32.xlu0 %v1637
        %v1674 = vpop.xlane.xlu0 %1673
        %1675 = vmax.xlane.f32.xlu0 %v1640
        %v1676 = vpop.xlane.xlu0 %1675
        %1677 = vmax.xlane.f32.xlu0 %v1642
        %v1678 = vpop.xlane.xlu0 %1677
        %1679 = vmax.xlane.f32.xlu0 %v1645
        %v1680 = vpop.xlane.xlu0 %1679
        %1681 = vmax.xlane.f32.xlu0 %v1647
        %v1682 = vpop.xlane.xlu0 %1681
        %1683 = vmax.xlane.f32.xlu0 %v1650
        %v1684 = vpop.xlane.xlu0 %1683
        %1685 = vmax.xlane.f32.xlu0 %v1652
        %v1686 = vpop.xlane.xlu0 %1685
        %1687 = vmax.xlane.f32.xlu0 %v1655
        %v1688 = vpop.xlane.xlu0 %1687
        %1689 = vmax.xlane.f32.xlu0 %v1657
        %v1690 = vpop.xlane.xlu0 %1689
        %v1691 = vsub.f32 %v1620, %v1660
        %v1692 = vsub.f32 %v1622, %v1662
        %v1693 = vsub.f32 %v1625, %v1664
        %v1694 = vsub.f32 %v1627, %v1666
        %v1695 = vsub.f32 %v1630, %v1668
        %v1696 = vsub.f32 %v1632, %v1670
        %v1697 = vsub.f32 %v1635, %v1672
        %v1698 = vsub.f32 %v1637, %v1674
        %v1699 = vsub.f32 %v1640, %v1676
        %v1700 = vsub.f32 %v1642, %v1678
        %v1701 = vsub.f32 %v1645, %v1680
        %v1702 = vsub.f32 %v1647, %v1682
        %v1703 = vsub.f32 %v1650, %v1684
        %v1704 = vsub.f32 %v1652, %v1686
        %v1705 = vsub.f32 %v1655, %v1688
        %v1706 = vsub.f32 %v1657, %v1690
        %v1707 = vmul.f32 %v1691, 1.442695
        %v1708 = vpow.pop %v1707
        %v1709 = vmul.f32 %v1692, 1.442695
        %v1710 = vpow.pop %v1709
        %v1711 = vmul.f32 %v1693, 1.442695
        %v1712 = vpow.pop %v1711
        %v1713 = vmul.f32 %v1694, 1.442695
        %v1714 = vpow.pop %v1713
        %v1715 = vmul.f32 %v1695, 1.442695
        %v1716 = vpow.pop %v1715
        %v1717 = vmul.f32 %v1696, 1.442695
        %v1718 = vpow.pop %v1717
        %v1719 = vmul.f32 %v1697, 1.442695
        %v1720 = vpow.pop %v1719
        %v1721 = vmul.f32 %v1698, 1.442695
        %v1722 = vpow.pop %v1721
        %v1723 = vmul.f32 %v1699, 1.442695
        %v1724 = vpow.pop %v1723
        %v1725 = vmul.f32 %v1700, 1.442695
        %v1726 = vpow.pop %v1725
        %v1727 = vmul.f32 %v1701, 1.442695
        %v1728 = vpow.pop %v1727
        %v1729 = vmul.f32 %v1702, 1.442695
        %v1730 = vpow.pop %v1729
        %v1731 = vmul.f32 %v1703, 1.442695
        %v1732 = vpow.pop %v1731
        %v1733 = vmul.f32 %v1704, 1.442695
        %v1734 = vpow.pop %v1733
        %v1735 = vmul.f32 %v1705, 1.442695
        %v1736 = vpow.pop %v1735
        %v1737 = vmul.f32 %v1706, 1.442695
        %v1738 = vpow.pop %v1737
        %1739 = vadd.xlane.f32.xlu0 %v1708
        %v1740 = vpop.xlane.xlu0 %1739
        %1741 = vadd.xlane.f32.xlu0 %v1710
        %v1742 = vpop.xlane.xlu0 %1741
        %1743 = vadd.xlane.f32.xlu0 %v1712
        %v1744 = vpop.xlane.xlu0 %1743
        %1745 = vadd.xlane.f32.xlu0 %v1714
        %v1746 = vpop.xlane.xlu0 %1745
        %1747 = vadd.xlane.f32.xlu0 %v1716
        %v1748 = vpop.xlane.xlu0 %1747
        %1749 = vadd.xlane.f32.xlu0 %v1718
        %v1750 = vpop.xlane.xlu0 %1749
        %1751 = vadd.xlane.f32.xlu0 %v1720
        %v1752 = vpop.xlane.xlu0 %1751
        %1753 = vadd.xlane.f32.xlu0 %v1722
        %v1754 = vpop.xlane.xlu0 %1753
        %1755 = vadd.xlane.f32.xlu0 %v1724
        %v1756 = vpop.xlane.xlu0 %1755
        %1757 = vadd.xlane.f32.xlu0 %v1726
        %v1758 = vpop.xlane.xlu0 %1757
        %1759 = vadd.xlane.f32.xlu0 %v1728
        %v1760 = vpop.xlane.xlu0 %1759
        %1761 = vadd.xlane.f32.xlu0 %v1730
        %v1762 = vpop.xlane.xlu0 %1761
        %1763 = vadd.xlane.f32.xlu0 %v1732
        %v1764 = vpop.xlane.xlu0 %1763
        %1765 = vadd.xlane.f32.xlu0 %v1734
        %v1766 = vpop.xlane.xlu0 %1765
        %1767 = vadd.xlane.f32.xlu0 %v1736
        %v1768 = vpop.xlane.xlu0 %1767
        %1769 = vadd.xlane.f32.xlu0 %v1738
        %v1770 = vpop.xlane.xlu0 %1769
        %v1771 = vpack.c.bf16 %v1708, %v1708
        %v1772 = vpack.c.bf16 %v1710, %v1710
        %v1773 = vpack.c.bf16 %v1712, %v1712
        %v1774 = vpack.c.bf16 %v1714, %v1714
        %v1775 = vpack.c.bf16 %v1716, %v1716
        %v1776 = vpack.c.bf16 %v1718, %v1718
        %v1777 = vpack.c.bf16 %v1720, %v1720
        %v1778 = vpack.c.bf16 %v1722, %v1722
        %v1779 = vpack.c.bf16 %v1724, %v1724
        %v1780 = vpack.c.bf16 %v1726, %v1726
        %v1781 = vpack.c.bf16 %v1728, %v1728
        %v1782 = vpack.c.bf16 %v1730, %v1730
        %v1783 = vpack.c.bf16 %v1732, %v1732
        %v1784 = vpack.c.bf16 %v1734, %v1734
        %v1785 = vpack.c.bf16 %v1736, %v1736
        %v1786 = vpack.c.bf16 %v1738, %v1738
        %v1803 = vunpack.c.l.b16 %v1771
        %v1804 = vunpack.c.l.b16 %v1772
        %v1805 = vunpack.c.l.b16 %v1773
        %v1806 = vunpack.c.l.b16 %v1774
        %v1807 = vunpack.c.l.b16 %v1775
        %v1808 = vunpack.c.l.b16 %v1776
        %v1809 = vunpack.c.l.b16 %v1777
        %v1810 = vunpack.c.l.b16 %v1778
        %v1811 = vunpack.c.l.b16 %v1779
        %v1812 = vunpack.c.l.b16 %v1780
        %v1813 = vunpack.c.l.b16 %v1781
        %v1814 = vunpack.c.l.b16 %v1782
        %v1815 = vunpack.c.l.b16 %v1783
        %v1816 = vunpack.c.l.b16 %v1784
        %v1817 = vunpack.c.l.b16 %v1785
        %v1818 = vunpack.c.l.b16 %v1786
        %v1819 = vpack.c.b16 %v1804, %v1803
        %v1820 = vpack.c.b16 %v1806, %v1805
        %v1821 = vpack.c.b16 %v1808, %v1807
        %v1822 = vpack.c.b16 %v1810, %v1809
        %v1823 = vpack.c.b16 %v1812, %v1811
        %v1824 = vpack.c.b16 %v1814, %v1813
        %v1825 = vpack.c.b16 %v1816, %v1815
        %v1826 = vpack.c.b16 %v1818, %v1817
        %1835 = vrot.lane.b32.xlu0 %v1023, 64
        %v1836 = vpop.permute.xlu0 %1835
        %1837 = vrot.lane.b32.xlu0 %v1024, 64
        %v1838 = vpop.permute.xlu0 %1837
        %1839 = vrot.lane.b32.xlu0 %v1025, 64
        %v1840 = vpop.permute.xlu0 %1839
        %1841 = vrot.lane.b32.xlu0 %v1026, 64
        %v1842 = vpop.permute.xlu0 %1841
        %1843 = vrot.lane.b32.xlu0 %v1027, 64
        %v1844 = vpop.permute.xlu0 %1843
        %1845 = vrot.lane.b32.xlu0 %v1028, 64
        %v1846 = vpop.permute.xlu0 %1845
        %1847 = vrot.lane.b32.xlu0 %v1029, 64
        %v1848 = vpop.permute.xlu0 %1847
        %1849 = vrot.lane.b32.xlu0 %v1030, 64
        %v1850 = vpop.permute.xlu0 %1849
        %1859 = vmatpush.bf16.msra.mxu0 %v1850
        %1860 = vmatpush.bf16.msra.mxu0 %v1848
        %1861 = vmatpush.bf16.msra.mxu0 %v1846
        %1862 = vmatpush.bf16.msra.mxu0 %v1844
        %1863 = vmatpush.bf16.msra.mxu0 %v1842
        %1864 = vmatpush.bf16.msra.mxu0 %v1840
        %1865 = vmatpush.bf16.msra.mxu0 %v1838
        %1866 = vmatpush.bf16.msra.mxu0 %v1836
        %1867 = vmatmul.bf16.gmra.mxu0 %v1819
        %v1868 = vpop.f32.mrf.mxu0
        %v1869 = vadd.f32 0.0, %v1868
        %v1870 = vpop.f32.mrf.mxu0
        %v1871 = vadd.f32 0.0, %v1870
        %1872 = vmatmul.bf16.gmra.mxu0 %v1820
        %v1873 = vpop.f32.mrf.mxu0
        %v1874 = vadd.f32 0.0, %v1873
        %v1875 = vpop.f32.mrf.mxu0
        %v1876 = vadd.f32 0.0, %v1875
        %1877 = vmatmul.bf16.gmra.mxu0 %v1821
        %v1878 = vpop.f32.mrf.mxu0
        %v1879 = vadd.f32 0.0, %v1878
        %v1880 = vpop.f32.mrf.mxu0
        %v1881 = vadd.f32 0.0, %v1880
        %1882 = vmatmul.bf16.gmra.mxu0 %v1822
        %v1883 = vpop.f32.mrf.mxu0
        %v1884 = vadd.f32 0.0, %v1883
        %v1885 = vpop.f32.mrf.mxu0
        %v1886 = vadd.f32 0.0, %v1885
        %1887 = vmatmul.bf16.gmra.mxu0 %v1823
        %v1888 = vpop.f32.mrf.mxu0
        %v1889 = vadd.f32 0.0, %v1888
        %v1890 = vpop.f32.mrf.mxu0
        %v1891 = vadd.f32 0.0, %v1890
        %1892 = vmatmul.bf16.gmra.mxu0 %v1824
        %v1893 = vpop.f32.mrf.mxu0
        %v1894 = vadd.f32 0.0, %v1893
        %v1895 = vpop.f32.mrf.mxu0
        %v1896 = vadd.f32 0.0, %v1895
        %1897 = vmatmul.bf16.gmra.mxu0 %v1825
        %v1898 = vpop.f32.mrf.mxu0
        %v1899 = vadd.f32 0.0, %v1898
        %v1900 = vpop.f32.mrf.mxu0
        %v1901 = vadd.f32 0.0, %v1900
        %1902 = vmatmul.bf16.gmra.mxu0 %v1826
        %v1903 = vpop.f32.mrf.mxu0
        %v1904 = vadd.f32 0.0, %v1903
        %v1905 = vpop.f32.mrf.mxu0
        %v1906 = vadd.f32 0.0, %v1905
        %1907 = vdwg.mxu0
        %v1908 = vrcp.pop %v1740
        %v1909 = vrcp.pop %v1742
        %v1910 = vrcp.pop %v1744
        %v1911 = vrcp.pop %v1746
        %v1912 = vrcp.pop %v1748
        %v1913 = vrcp.pop %v1750
        %v1914 = vrcp.pop %v1752
        %v1915 = vrcp.pop %v1754
        %v1916 = vrcp.pop %v1756
        %v1917 = vrcp.pop %v1758
        %v1918 = vrcp.pop %v1760
        %v1919 = vrcp.pop %v1762
        %v1920 = vrcp.pop %v1764
        %v1921 = vrcp.pop %v1766
        %v1922 = vrcp.pop %v1768
        %v1923 = vrcp.pop %v1770
        %v1924 = vmul.f32 %v1869, %v1908
        %v1925 = vmul.f32 %v1871, %v1909
        %v1926 = vmul.f32 %v1874, %v1910
        %v1927 = vmul.f32 %v1876, %v1911
        %v1928 = vmul.f32 %v1879, %v1912
        %v1929 = vmul.f32 %v1881, %v1913
        %v1930 = vmul.f32 %v1884, %v1914
        %v1931 = vmul.f32 %v1886, %v1915
        %v1932 = vmul.f32 %v1889, %v1916
        %v1933 = vmul.f32 %v1891, %v1917
        %v1934 = vmul.f32 %v1894, %v1918
        %v1935 = vmul.f32 %v1896, %v1919
        %v1936 = vmul.f32 %v1899, %v1920
        %v1937 = vmul.f32 %v1901, %v1921
        %v1938 = vmul.f32 %v1904, %v1922
        %v1939 = vmul.f32 %v1906, %v1923
        %1940 = vrot.lane.b32.xlu0 %v669, 32
        %v1941 = vpop.permute.xlu0 %1940
        %1942 = vrot.lane.b32.xlu0 %v670, 32
        %v1943 = vpop.permute.xlu0 %1942
        %1944 = vrot.lane.b32.xlu0 %v671, 32
        %v1945 = vpop.permute.xlu0 %1944
        %1946 = vrot.lane.b32.xlu0 %v672, 32
        %v1947 = vpop.permute.xlu0 %1946
        %1948 = vrot.lane.b32.xlu0 %v673, 32
        %v1949 = vpop.permute.xlu0 %1948
        %1950 = vrot.lane.b32.xlu0 %v674, 32
        %v1951 = vpop.permute.xlu0 %1950
        %1952 = vrot.lane.b32.xlu0 %v675, 32
        %v1953 = vpop.permute.xlu0 %1952
        %1954 = vrot.lane.b32.xlu0 %v676, 32
        %v1955 = vpop.permute.xlu0 %1954
        %1956 = vrot.lane.b32.xlu0 %v709, 32
        %v1957 = vpop.permute.xlu0 %1956
        %1958 = vrot.lane.b32.xlu0 %v710, 32
        %v1959 = vpop.permute.xlu0 %1958
        %1960 = vrot.lane.b32.xlu0 %v711, 32
        %v1961 = vpop.permute.xlu0 %1960
        %1962 = vrot.lane.b32.xlu0 %v712, 32
        %v1963 = vpop.permute.xlu0 %1962
        %1964 = vrot.lane.b32.xlu0 %v713, 32
        %v1965 = vpop.permute.xlu0 %1964
        %1966 = vrot.lane.b32.xlu0 %v714, 32
        %v1967 = vpop.permute.xlu0 %1966
        %1968 = vrot.lane.b32.xlu0 %v715, 32
        %v1969 = vpop.permute.xlu0 %1968
        %1970 = vrot.lane.b32.xlu0 %v716, 32
        %v1971 = vpop.permute.xlu0 %1970
        %v1973 = vsel %vm717, %v1941, 0
        %v1976 = vsel %vm717, %v1943, 0
        %v1979 = vsel %vm717, %v1945, 0
        %v1982 = vsel %vm717, %v1947, 0
        %v1985 = vsel %vm717, %v1949, 0
        %v1988 = vsel %vm717, %v1951, 0
        %v1991 = vsel %vm717, %v1953, 0
        %v1994 = vsel %vm717, %v1955, 0
        %v1997 = vsel %vm717, %v1957, 0
        %v2000 = vsel %vm717, %v1959, 0
        %v2003 = vsel %vm717, %v1961, 0
        %v2006 = vsel %vm717, %v1963, 0
        %v2009 = vsel %vm717, %v1965, 0
        %v2012 = vsel %vm717, %v1967, 0
        %v2015 = vsel %vm717, %v1969, 0
        %v2018 = vsel %vm717, %v1971, 0
        %2020 = vmatpush.bf16.xpose.msra.mxu0 %v2018
        %2021 = vmatpush.bf16.xpose.msra.mxu0 %v2015
        %2022 = vmatpush.bf16.xpose.msra.mxu0 %v2012
        %2023 = vmatpush.bf16.xpose.msra.mxu0 %v2009
        %2024 = vmatpush.bf16.xpose.msra.mxu0 %v2006
        %2025 = vmatpush.bf16.xpose.msra.mxu0 %v2003
        %2026 = vmatpush.bf16.xpose.msra.mxu0 %v2000
        %2027 = vmatpush.bf16.xpose.msra.mxu0 %v1997
        %2028 = vmatmul.bf16.gmra.mxu0 %v1973
        %v2029 = vpop.f32.mrf.mxu0
        %v2030 = vadd.f32 0.0, %v2029
        %v2031 = vpop.f32.mrf.mxu0
        %v2032 = vadd.f32 0.0, %v2031
        %2033 = vmatmul.bf16.gmra.mxu0 %v1976
        %v2034 = vpop.f32.mrf.mxu0
        %v2035 = vadd.f32 0.0, %v2034
        %v2036 = vpop.f32.mrf.mxu0
        %v2037 = vadd.f32 0.0, %v2036
        %2038 = vmatmul.bf16.gmra.mxu0 %v1979
        %v2039 = vpop.f32.mrf.mxu0
        %v2040 = vadd.f32 0.0, %v2039
        %v2041 = vpop.f32.mrf.mxu0
        %v2042 = vadd.f32 0.0, %v2041
        %2043 = vmatmul.bf16.gmra.mxu0 %v1982
        %v2044 = vpop.f32.mrf.mxu0
        %v2045 = vadd.f32 0.0, %v2044
        %v2046 = vpop.f32.mrf.mxu0
        %v2047 = vadd.f32 0.0, %v2046
        %2048 = vmatmul.bf16.gmra.mxu0 %v1985
        %v2049 = vpop.f32.mrf.mxu0
        %v2050 = vadd.f32 0.0, %v2049
        %v2051 = vpop.f32.mrf.mxu0
        %v2052 = vadd.f32 0.0, %v2051
        %2053 = vmatmul.bf16.gmra.mxu0 %v1988
        %v2054 = vpop.f32.mrf.mxu0
        %v2055 = vadd.f32 0.0, %v2054
        %v2056 = vpop.f32.mrf.mxu0
        %v2057 = vadd.f32 0.0, %v2056
        %2058 = vmatmul.bf16.gmra.mxu0 %v1991
        %v2059 = vpop.f32.mrf.mxu0
        %v2060 = vadd.f32 0.0, %v2059
        %v2061 = vpop.f32.mrf.mxu0
        %v2062 = vadd.f32 0.0, %v2061
        %2063 = vmatmul.bf16.gmra.mxu0 %v1994
        %v2064 = vpop.f32.mrf.mxu0
        %v2065 = vadd.f32 0.0, %v2064
        %v2066 = vpop.f32.mrf.mxu0
        %v2067 = vadd.f32 0.0, %v2066
        %2068 = vdwg.mxu0
        %2069 = vmax.xlane.f32.xlu0 %v2030
        %v2070 = vpop.xlane.xlu0 %2069
        %2071 = vmax.xlane.f32.xlu0 %v2032
        %v2072 = vpop.xlane.xlu0 %2071
        %2073 = vmax.xlane.f32.xlu0 %v2035
        %v2074 = vpop.xlane.xlu0 %2073
        %2075 = vmax.xlane.f32.xlu0 %v2037
        %v2076 = vpop.xlane.xlu0 %2075
        %2077 = vmax.xlane.f32.xlu0 %v2040
        %v2078 = vpop.xlane.xlu0 %2077
        %2079 = vmax.xlane.f32.xlu0 %v2042
        %v2080 = vpop.xlane.xlu0 %2079
        %2081 = vmax.xlane.f32.xlu0 %v2045
        %v2082 = vpop.xlane.xlu0 %2081
        %2083 = vmax.xlane.f32.xlu0 %v2047
        %v2084 = vpop.xlane.xlu0 %2083
        %2085 = vmax.xlane.f32.xlu0 %v2050
        %v2086 = vpop.xlane.xlu0 %2085
        %2087 = vmax.xlane.f32.xlu0 %v2052
        %v2088 = vpop.xlane.xlu0 %2087
        %2089 = vmax.xlane.f32.xlu0 %v2055
        %v2090 = vpop.xlane.xlu0 %2089
        %2091 = vmax.xlane.f32.xlu0 %v2057
        %v2092 = vpop.xlane.xlu0 %2091
        %2093 = vmax.xlane.f32.xlu0 %v2060
        %v2094 = vpop.xlane.xlu0 %2093
        %2095 = vmax.xlane.f32.xlu0 %v2062
        %v2096 = vpop.xlane.xlu0 %2095
        %2097 = vmax.xlane.f32.xlu0 %v2065
        %v2098 = vpop.xlane.xlu0 %2097
        %2099 = vmax.xlane.f32.xlu0 %v2067
        %v2100 = vpop.xlane.xlu0 %2099
        %v2101 = vsub.f32 %v2030, %v2070
        %v2102 = vsub.f32 %v2032, %v2072
        %v2103 = vsub.f32 %v2035, %v2074
        %v2104 = vsub.f32 %v2037, %v2076
        %v2105 = vsub.f32 %v2040, %v2078
        %v2106 = vsub.f32 %v2042, %v2080
        %v2107 = vsub.f32 %v2045, %v2082
        %v2108 = vsub.f32 %v2047, %v2084
        %v2109 = vsub.f32 %v2050, %v2086
        %v2110 = vsub.f32 %v2052, %v2088
        %v2111 = vsub.f32 %v2055, %v2090
        %v2112 = vsub.f32 %v2057, %v2092
        %v2113 = vsub.f32 %v2060, %v2094
        %v2114 = vsub.f32 %v2062, %v2096
        %v2115 = vsub.f32 %v2065, %v2098
        %v2116 = vsub.f32 %v2067, %v2100
        %v2117 = vmul.f32 %v2101, 1.442695
        %v2118 = vpow.pop %v2117
        %v2119 = vmul.f32 %v2102, 1.442695
        %v2120 = vpow.pop %v2119
        %v2121 = vmul.f32 %v2103, 1.442695
        %v2122 = vpow.pop %v2121
        %v2123 = vmul.f32 %v2104, 1.442695
        %v2124 = vpow.pop %v2123
        %v2125 = vmul.f32 %v2105, 1.442695
        %v2126 = vpow.pop %v2125
        %v2127 = vmul.f32 %v2106, 1.442695
        %v2128 = vpow.pop %v2127
        %v2129 = vmul.f32 %v2107, 1.442695
        %v2130 = vpow.pop %v2129
        %v2131 = vmul.f32 %v2108, 1.442695
        %v2132 = vpow.pop %v2131
        %v2133 = vmul.f32 %v2109, 1.442695
        %v2134 = vpow.pop %v2133
        %v2135 = vmul.f32 %v2110, 1.442695
        %v2136 = vpow.pop %v2135
        %v2137 = vmul.f32 %v2111, 1.442695
        %v2138 = vpow.pop %v2137
        %v2139 = vmul.f32 %v2112, 1.442695
        %v2140 = vpow.pop %v2139
        %v2141 = vmul.f32 %v2113, 1.442695
        %v2142 = vpow.pop %v2141
        %v2143 = vmul.f32 %v2114, 1.442695
        %v2144 = vpow.pop %v2143
        %v2145 = vmul.f32 %v2115, 1.442695
        %v2146 = vpow.pop %v2145
        %v2147 = vmul.f32 %v2116, 1.442695
        %v2148 = vpow.pop %v2147
        %2149 = vadd.xlane.f32.xlu0 %v2118
        %v2150 = vpop.xlane.xlu0 %2149
        %2151 = vadd.xlane.f32.xlu0 %v2120
        %v2152 = vpop.xlane.xlu0 %2151
        %2153 = vadd.xlane.f32.xlu0 %v2122
        %v2154 = vpop.xlane.xlu0 %2153
        %2155 = vadd.xlane.f32.xlu0 %v2124
        %v2156 = vpop.xlane.xlu0 %2155
        %2157 = vadd.xlane.f32.xlu0 %v2126
        %v2158 = vpop.xlane.xlu0 %2157
        %2159 = vadd.xlane.f32.xlu0 %v2128
        %v2160 = vpop.xlane.xlu0 %2159
        %2161 = vadd.xlane.f32.xlu0 %v2130
        %v2162 = vpop.xlane.xlu0 %2161
        %2163 = vadd.xlane.f32.xlu0 %v2132
        %v2164 = vpop.xlane.xlu0 %2163
        %2165 = vadd.xlane.f32.xlu0 %v2134
        %v2166 = vpop.xlane.xlu0 %2165
        %2167 = vadd.xlane.f32.xlu0 %v2136
        %v2168 = vpop.xlane.xlu0 %2167
        %2169 = vadd.xlane.f32.xlu0 %v2138
        %v2170 = vpop.xlane.xlu0 %2169
        %2171 = vadd.xlane.f32.xlu0 %v2140
        %v2172 = vpop.xlane.xlu0 %2171
        %2173 = vadd.xlane.f32.xlu0 %v2142
        %v2174 = vpop.xlane.xlu0 %2173
        %2175 = vadd.xlane.f32.xlu0 %v2144
        %v2176 = vpop.xlane.xlu0 %2175
        %2177 = vadd.xlane.f32.xlu0 %v2146
        %v2178 = vpop.xlane.xlu0 %2177
        %2179 = vadd.xlane.f32.xlu0 %v2148
        %v2180 = vpop.xlane.xlu0 %2179
        %v2181 = vpack.c.bf16 %v2118, %v2118
        %v2182 = vpack.c.bf16 %v2120, %v2120
        %v2183 = vpack.c.bf16 %v2122, %v2122
        %v2184 = vpack.c.bf16 %v2124, %v2124
        %v2185 = vpack.c.bf16 %v2126, %v2126
        %v2186 = vpack.c.bf16 %v2128, %v2128
        %v2187 = vpack.c.bf16 %v2130, %v2130
        %v2188 = vpack.c.bf16 %v2132, %v2132
        %v2189 = vpack.c.bf16 %v2134, %v2134
        %v2190 = vpack.c.bf16 %v2136, %v2136
        %v2191 = vpack.c.bf16 %v2138, %v2138
        %v2192 = vpack.c.bf16 %v2140, %v2140
        %v2193 = vpack.c.bf16 %v2142, %v2142
        %v2194 = vpack.c.bf16 %v2144, %v2144
        %v2195 = vpack.c.bf16 %v2146, %v2146
        %v2196 = vpack.c.bf16 %v2148, %v2148
        %v2213 = vunpack.c.l.b16 %v2181
        %v2214 = vunpack.c.l.b16 %v2182
        %v2215 = vunpack.c.l.b16 %v2183
        %v2216 = vunpack.c.l.b16 %v2184
        %v2217 = vunpack.c.l.b16 %v2185
        %v2218 = vunpack.c.l.b16 %v2186
        %v2219 = vunpack.c.l.b16 %v2187
        %v2220 = vunpack.c.l.b16 %v2188
        %v2221 = vunpack.c.l.b16 %v2189
        %v2222 = vunpack.c.l.b16 %v2190
        %v2223 = vunpack.c.l.b16 %v2191
        %v2224 = vunpack.c.l.b16 %v2192
        %v2225 = vunpack.c.l.b16 %v2193
        %v2226 = vunpack.c.l.b16 %v2194
        %v2227 = vunpack.c.l.b16 %v2195
        %v2228 = vunpack.c.l.b16 %v2196
        %v2229 = vpack.c.b16 %v2214, %v2213
        %v2230 = vpack.c.b16 %v2216, %v2215
        %v2231 = vpack.c.b16 %v2218, %v2217
        %v2232 = vpack.c.b16 %v2220, %v2219
        %v2233 = vpack.c.b16 %v2222, %v2221
        %v2234 = vpack.c.b16 %v2224, %v2223
        %v2235 = vpack.c.b16 %v2226, %v2225
        %v2236 = vpack.c.b16 %v2228, %v2227
        %2245 = vrot.lane.b32.xlu0 %v1023, 32
        %v2246 = vpop.permute.xlu0 %2245
        %2247 = vrot.lane.b32.xlu0 %v1024, 32
        %v2248 = vpop.permute.xlu0 %2247
        %2249 = vrot.lane.b32.xlu0 %v1025, 32
        %v2250 = vpop.permute.xlu0 %2249
        %2251 = vrot.lane.b32.xlu0 %v1026, 32
        %v2252 = vpop.permute.xlu0 %2251
        %2253 = vrot.lane.b32.xlu0 %v1027, 32
        %v2254 = vpop.permute.xlu0 %2253
        %2255 = vrot.lane.b32.xlu0 %v1028, 32
        %v2256 = vpop.permute.xlu0 %2255
        %2257 = vrot.lane.b32.xlu0 %v1029, 32
        %v2258 = vpop.permute.xlu0 %2257
        %2259 = vrot.lane.b32.xlu0 %v1030, 32
        %v2260 = vpop.permute.xlu0 %2259
        %2269 = vmatpush.bf16.msra.mxu0 %v2260
        %2270 = vmatpush.bf16.msra.mxu0 %v2258
        %2271 = vmatpush.bf16.msra.mxu0 %v2256
        %2272 = vmatpush.bf16.msra.mxu0 %v2254
        %2273 = vmatpush.bf16.msra.mxu0 %v2252
        %2274 = vmatpush.bf16.msra.mxu0 %v2250
        %2275 = vmatpush.bf16.msra.mxu0 %v2248
        %2276 = vmatpush.bf16.msra.mxu0 %v2246
        %2277 = vmatmul.bf16.gmra.mxu0 %v2229
        %v2278 = vpop.f32.mrf.mxu0
        %v2279 = vadd.f32 0.0, %v2278
        %v2280 = vpop.f32.mrf.mxu0
        %v2281 = vadd.f32 0.0, %v2280
        %2282 = vmatmul.bf16.gmra.mxu0 %v2230
        %v2283 = vpop.f32.mrf.mxu0
        %v2284 = vadd.f32 0.0, %v2283
        %v2285 = vpop.f32.mrf.mxu0
        %v2286 = vadd.f32 0.0, %v2285
        %2287 = vmatmul.bf16.gmra.mxu0 %v2231
        %v2288 = vpop.f32.mrf.mxu0
        %v2289 = vadd.f32 0.0, %v2288
        %v2290 = vpop.f32.mrf.mxu0
        %v2291 = vadd.f32 0.0, %v2290
        %2292 = vmatmul.bf16.gmra.mxu0 %v2232
        %v2293 = vpop.f32.mrf.mxu0
        %v2294 = vadd.f32 0.0, %v2293
        %v2295 = vpop.f32.mrf.mxu0
        %v2296 = vadd.f32 0.0, %v2295
        %2297 = vmatmul.bf16.gmra.mxu0 %v2233
        %v2298 = vpop.f32.mrf.mxu0
        %v2299 = vadd.f32 0.0, %v2298
        %v2300 = vpop.f32.mrf.mxu0
        %v2301 = vadd.f32 0.0, %v2300
        %2302 = vmatmul.bf16.gmra.mxu0 %v2234
        %v2303 = vpop.f32.mrf.mxu0
        %v2304 = vadd.f32 0.0, %v2303
        %v2305 = vpop.f32.mrf.mxu0
        %v2306 = vadd.f32 0.0, %v2305
        %2307 = vmatmul.bf16.gmra.mxu0 %v2235
        %v2308 = vpop.f32.mrf.mxu0
        %v2309 = vadd.f32 0.0, %v2308
        %v2310 = vpop.f32.mrf.mxu0
        %v2311 = vadd.f32 0.0, %v2310
        %2312 = vmatmul.bf16.gmra.mxu0 %v2236
        %v2313 = vpop.f32.mrf.mxu0
        %v2314 = vadd.f32 0.0, %v2313
        %v2315 = vpop.f32.mrf.mxu0
        %v2316 = vadd.f32 0.0, %v2315
        %2317 = vdwg.mxu0
        %v2318 = vrcp.pop %v2150
        %v2319 = vrcp.pop %v2152
        %v2320 = vrcp.pop %v2154
        %v2321 = vrcp.pop %v2156
        %v2322 = vrcp.pop %v2158
        %v2323 = vrcp.pop %v2160
        %v2324 = vrcp.pop %v2162
        %v2325 = vrcp.pop %v2164
        %v2326 = vrcp.pop %v2166
        %v2327 = vrcp.pop %v2168
        %v2328 = vrcp.pop %v2170
        %v2329 = vrcp.pop %v2172
        %v2330 = vrcp.pop %v2174
        %v2331 = vrcp.pop %v2176
        %v2332 = vrcp.pop %v2178
        %v2333 = vrcp.pop %v2180
        %v2334 = vmul.f32 %v2279, %v2318
        %v2335 = vmul.f32 %v2281, %v2319
        %v2336 = vmul.f32 %v2284, %v2320
        %v2337 = vmul.f32 %v2286, %v2321
        %v2338 = vmul.f32 %v2289, %v2322
        %v2339 = vmul.f32 %v2291, %v2323
        %v2340 = vmul.f32 %v2294, %v2324
        %v2341 = vmul.f32 %v2296, %v2325
        %v2342 = vmul.f32 %v2299, %v2326
        %v2343 = vmul.f32 %v2301, %v2327
        %v2344 = vmul.f32 %v2304, %v2328
        %v2345 = vmul.f32 %v2306, %v2329
        %v2346 = vmul.f32 %v2309, %v2330
        %v2347 = vmul.f32 %v2311, %v2331
        %v2348 = vmul.f32 %v2314, %v2332
        %v2349 = vmul.f32 %v2316, %v2333
        %2366 = vrot.lane.b32.xlu0 %v1514, 32
        %v2367 = vpop.permute.xlu0 %2366
        %2368 = vrot.lane.b32.xlu0 %v1515, 32
        %v2369 = vpop.permute.xlu0 %2368
        %2370 = vrot.lane.b32.xlu0 %v1516, 32
        %v2371 = vpop.permute.xlu0 %2370
        %2372 = vrot.lane.b32.xlu0 %v1517, 32
        %v2373 = vpop.permute.xlu0 %2372
        %2374 = vrot.lane.b32.xlu0 %v1518, 32
        %v2375 = vpop.permute.xlu0 %2374
        %2376 = vrot.lane.b32.xlu0 %v1519, 32
        %v2377 = vpop.permute.xlu0 %2376
        %2378 = vrot.lane.b32.xlu0 %v1520, 32
        %v2379 = vpop.permute.xlu0 %2378
        %2380 = vrot.lane.b32.xlu0 %v1521, 32
        %v2381 = vpop.permute.xlu0 %2380
        %2382 = vrot.lane.b32.xlu0 %v1522, 32
        %v2383 = vpop.permute.xlu0 %2382
        %2384 = vrot.lane.b32.xlu0 %v1523, 32
        %v2385 = vpop.permute.xlu0 %2384
        %2386 = vrot.lane.b32.xlu0 %v1524, 32
        %v2387 = vpop.permute.xlu0 %2386
        %2388 = vrot.lane.b32.xlu0 %v1525, 32
        %v2389 = vpop.permute.xlu0 %2388
        %2390 = vrot.lane.b32.xlu0 %v1526, 32
        %v2391 = vpop.permute.xlu0 %2390
        %2392 = vrot.lane.b32.xlu0 %v1527, 32
        %v2393 = vpop.permute.xlu0 %2392
        %2394 = vrot.lane.b32.xlu0 %v1528, 32
        %v2395 = vpop.permute.xlu0 %2394
        %2396 = vrot.lane.b32.xlu0 %v1529, 32
        %v2397 = vpop.permute.xlu0 %2396
        %2430 = vrot.lane.b32.xlu0 %v1924, 64
        %v2431 = vpop.permute.xlu0 %2430
        %2432 = vrot.lane.b32.xlu0 %v1925, 64
        %v2433 = vpop.permute.xlu0 %2432
        %2434 = vrot.lane.b32.xlu0 %v1926, 64
        %v2435 = vpop.permute.xlu0 %2434
        %2436 = vrot.lane.b32.xlu0 %v1927, 64
        %v2437 = vpop.permute.xlu0 %2436
        %2438 = vrot.lane.b32.xlu0 %v1928, 64
        %v2439 = vpop.permute.xlu0 %2438
        %2440 = vrot.lane.b32.xlu0 %v1929, 64
        %v2441 = vpop.permute.xlu0 %2440
        %2442 = vrot.lane.b32.xlu0 %v1930, 64
        %v2443 = vpop.permute.xlu0 %2442
        %2444 = vrot.lane.b32.xlu0 %v1931, 64
        %v2445 = vpop.permute.xlu0 %2444
        %2446 = vrot.lane.b32.xlu0 %v1932, 64
        %v2447 = vpop.permute.xlu0 %2446
        %2448 = vrot.lane.b32.xlu0 %v1933, 64
        %v2449 = vpop.permute.xlu0 %2448
        %2450 = vrot.lane.b32.xlu0 %v1934, 64
        %v2451 = vpop.permute.xlu0 %2450
        %2452 = vrot.lane.b32.xlu0 %v1935, 64
        %v2453 = vpop.permute.xlu0 %2452
        %2454 = vrot.lane.b32.xlu0 %v1936, 64
        %v2455 = vpop.permute.xlu0 %2454
        %2456 = vrot.lane.b32.xlu0 %v1937, 64
        %v2457 = vpop.permute.xlu0 %2456
        %2458 = vrot.lane.b32.xlu0 %v1938, 64
        %v2459 = vpop.permute.xlu0 %2458
        %2460 = vrot.lane.b32.xlu0 %v1939, 64
        %v2461 = vpop.permute.xlu0 %2460
        %2494 = vrot.lane.b32.xlu0 %v2334, 96
        %v2495 = vpop.permute.xlu0 %2494
        %2496 = vrot.lane.b32.xlu0 %v2335, 96
        %v2497 = vpop.permute.xlu0 %2496
        %2498 = vrot.lane.b32.xlu0 %v2336, 96
        %v2499 = vpop.permute.xlu0 %2498
        %2500 = vrot.lane.b32.xlu0 %v2337, 96
        %v2501 = vpop.permute.xlu0 %2500
        %2502 = vrot.lane.b32.xlu0 %v2338, 96
        %v2503 = vpop.permute.xlu0 %2502
        %2504 = vrot.lane.b32.xlu0 %v2339, 96
        %v2505 = vpop.permute.xlu0 %2504
        %2506 = vrot.lane.b32.xlu0 %v2340, 96
        %v2507 = vpop.permute.xlu0 %2506
        %2508 = vrot.lane.b32.xlu0 %v2341, 96
        %v2509 = vpop.permute.xlu0 %2508
        %2510 = vrot.lane.b32.xlu0 %v2342, 96
        %v2511 = vpop.permute.xlu0 %2510
        %2512 = vrot.lane.b32.xlu0 %v2343, 96
        %v2513 = vpop.permute.xlu0 %2512
        %2514 = vrot.lane.b32.xlu0 %v2344, 96
        %v2515 = vpop.permute.xlu0 %2514
        %2516 = vrot.lane.b32.xlu0 %v2345, 96
        %v2517 = vpop.permute.xlu0 %2516
        %2518 = vrot.lane.b32.xlu0 %v2346, 96
        %v2519 = vpop.permute.xlu0 %2518
        %2520 = vrot.lane.b32.xlu0 %v2347, 96
        %v2521 = vpop.permute.xlu0 %2520
        %2522 = vrot.lane.b32.xlu0 %v2348, 96
        %v2523 = vpop.permute.xlu0 %2522
        %2524 = vrot.lane.b32.xlu0 %v2349, 96
        %v2525 = vpop.permute.xlu0 %2524
        %v2542 = vsel %vm717, %v1104, %v2367
        %v2543 = vsel %vm717, %v1105, %v2369
        %v2544 = vsel %vm717, %v1106, %v2371
        %v2545 = vsel %vm717, %v1107, %v2373
        %v2546 = vsel %vm717, %v1108, %v2375
        %v2547 = vsel %vm717, %v1109, %v2377
        %v2548 = vsel %vm717, %v1110, %v2379
        %v2549 = vsel %vm717, %v1111, %v2381
        %v2550 = vsel %vm717, %v1112, %v2383
        %v2551 = vsel %vm717, %v1113, %v2385
        %v2552 = vsel %vm717, %v1114, %v2387
        %v2553 = vsel %vm717, %v1115, %v2389
        %v2554 = vsel %vm717, %v1116, %v2391
        %v2555 = vsel %vm717, %v1117, %v2393
        %v2556 = vsel %vm717, %v1118, %v2395
        %v2557 = vsel %vm717, %v1119, %v2397
        %v2558 = vsel %vm450, %v2542, %v2431
        %v2559 = vsel %vm450, %v2543, %v2433
        %v2560 = vsel %vm450, %v2544, %v2435
        %v2561 = vsel %vm450, %v2545, %v2437
        %v2562 = vsel %vm450, %v2546, %v2439
        %v2563 = vsel %vm450, %v2547, %v2441
        %v2564 = vsel %vm450, %v2548, %v2443
        %v2565 = vsel %vm450, %v2549, %v2445
        %v2566 = vsel %vm450, %v2550, %v2447
        %v2567 = vsel %vm450, %v2551, %v2449
        %v2568 = vsel %vm450, %v2552, %v2451
        %v2569 = vsel %vm450, %v2553, %v2453
        %v2570 = vsel %vm450, %v2554, %v2455
        %v2571 = vsel %vm450, %v2555, %v2457
        %v2572 = vsel %vm450, %v2556, %v2459
        %v2573 = vsel %vm450, %v2557, %v2461
        %vm2574 = vcmask 785408
        %v2575 = vsel %vm2574, %v2558, %v2495
        %v2576 = vsel %vm2574, %v2559, %v2497
        %v2577 = vsel %vm2574, %v2560, %v2499
        %v2578 = vsel %vm2574, %v2561, %v2501
        %v2579 = vsel %vm2574, %v2562, %v2503
        %v2580 = vsel %vm2574, %v2563, %v2505
        %v2581 = vsel %vm2574, %v2564, %v2507
        %v2582 = vsel %vm2574, %v2565, %v2509
        %v2583 = vsel %vm2574, %v2566, %v2511
        %v2584 = vsel %vm2574, %v2567, %v2513
        %v2585 = vsel %vm2574, %v2568, %v2515
        %v2586 = vsel %vm2574, %v2569, %v2517
        %v2587 = vsel %vm2574, %v2570, %v2519
        %v2588 = vsel %vm2574, %v2571, %v2521
        %v2589 = vsel %vm2574, %v2572, %v2523
        %v2590 = vsel %vm2574, %v2573, %v2525
        %v2591 = vpack.c.bf16 %v2576, %v2575
        %v2592 = vpack.c.bf16 %v2578, %v2577
        %v2593 = vpack.c.bf16 %v2580, %v2579
        %v2594 = vpack.c.bf16 %v2582, %v2581
        %v2595 = vpack.c.bf16 %v2584, %v2583
        %v2596 = vpack.c.bf16 %v2586, %v2585
        %v2597 = vpack.c.bf16 %v2588, %v2587
        %v2598 = vpack.c.bf16 %v2590, %v2589
        %v2599 = vld [vmem:[#allocation5] sm:$0xff]
        %v2600 = vld [vmem:[#allocation5 + $0x8] sm:$0xff]
        %v2601 = vld [vmem:[#allocation5 + $0x10] sm:$0xff]
        %v2602 = vld [vmem:[#allocation5 + $0x18] sm:$0xff]
        %v2603 = vld [vmem:[#allocation5 + $0x20] sm:$0xff]
        %v2604 = vld [vmem:[#allocation5 + $0x28] sm:$0xff]
        %v2605 = vld [vmem:[#allocation5 + $0x30] sm:$0xff]
        %v2606 = vld [vmem:[#allocation5 + $0x38] sm:$0xff]
        %v2607 = vld [vmem:[#allocation5 + $0x40] sm:$0xff]
        %v2608 = vld [vmem:[#allocation5 + $0x48] sm:$0xff]
        %v2609 = vld [vmem:[#allocation5 + $0x50] sm:$0xff]
        %v2610 = vld [vmem:[#allocation5 + $0x58] sm:$0xff]
        %v2611 = vld [vmem:[#allocation5 + $0x60] sm:$0xff]
        %v2612 = vld [vmem:[#allocation5 + $0x68] sm:$0xff]
        %v2613 = vld [vmem:[#allocation5 + $0x70] sm:$0xff]
        %v2614 = vld [vmem:[#allocation5 + $0x78] sm:$0xff]
        %v2615 = vpack.c.bf16 %v2600, %v2599
        %v2616 = vpack.c.bf16 %v2602, %v2601
        %v2617 = vpack.c.bf16 %v2604, %v2603
        %v2618 = vpack.c.bf16 %v2606, %v2605
        %v2619 = vpack.c.bf16 %v2608, %v2607
        %v2620 = vpack.c.bf16 %v2610, %v2609
        %v2621 = vpack.c.bf16 %v2612, %v2611
        %v2622 = vpack.c.bf16 %v2614, %v2613
        %v2623 = vld [vmem:[%s5] sm:$0x1]
        %v2625 = vperm.slane %v2623, 0
        %2627 = vmatpush.bf16.msra.mxu0 %v2622
        %2628 = vmatpush.bf16.msra.mxu0 %v2621
        %2629 = vmatpush.bf16.msra.mxu0 %v2620
        %2630 = vmatpush.bf16.msra.mxu0 %v2619
        %2631 = vmatpush.bf16.msra.mxu0 %v2618
        %2632 = vmatpush.bf16.msra.mxu0 %v2617
        %2633 = vmatpush.bf16.msra.mxu0 %v2616
        %2634 = vmatpush.bf16.msra.mxu0 %v2615
        %2635 = vmatmul.bf16.gmra.mxu0 %v2591
        %v2636 = vpop.f32.mrf.mxu0
        %v2637 = vadd.f32 %v2625, %v2636
        %v2638 = vpop.f32.mrf.mxu0
        %v2639 = vadd.f32 %v2625, %v2638
        %2640 = vmatmul.bf16.gmra.mxu0 %v2592
        %v2641 = vpop.f32.mrf.mxu0
        %v2642 = vadd.f32 %v2625, %v2641
        %v2643 = vpop.f32.mrf.mxu0
        %v2644 = vadd.f32 %v2625, %v2643
        %2645 = vmatmul.bf16.gmra.mxu0 %v2593
        %v2646 = vpop.f32.mrf.mxu0
        %v2647 = vadd.f32 %v2625, %v2646
        %v2648 = vpop.f32.mrf.mxu0
        %v2649 = vadd.f32 %v2625, %v2648
        %2650 = vmatmul.bf16.gmra.mxu0 %v2594
        %v2651 = vpop.f32.mrf.mxu0
        %v2652 = vadd.f32 %v2625, %v2651
        %v2653 = vpop.f32.mrf.mxu0
        %v2654 = vadd.f32 %v2625, %v2653
        %2655 = vmatmul.bf16.gmra.mxu0 %v2595
        %v2656 = vpop.f32.mrf.mxu0
        %v2657 = vadd.f32 %v2625, %v2656
        %v2658 = vpop.f32.mrf.mxu0
        %v2659 = vadd.f32 %v2625, %v2658
        %2660 = vmatmul.bf16.gmra.mxu0 %v2596
        %v2661 = vpop.f32.mrf.mxu0
        %v2662 = vadd.f32 %v2625, %v2661
        %v2663 = vpop.f32.mrf.mxu0
        %v2664 = vadd.f32 %v2625, %v2663
        %2665 = vmatmul.bf16.gmra.mxu0 %v2597
        %v2666 = vpop.f32.mrf.mxu0
        %v2667 = vadd.f32 %v2625, %v2666
        %v2668 = vpop.f32.mrf.mxu0
        %v2669 = vadd.f32 %v2625, %v2668
        %2670 = vmatmul.bf16.gmra.mxu0 %v2598
        %v2671 = vpop.f32.mrf.mxu0
        %v2672 = vadd.f32 %v2625, %v2671
        %v2673 = vpop.f32.mrf.mxu0
        %v2674 = vadd.f32 %v2625, %v2673
        %2675 = vdwg.mxu0
        %2676 = vst [vmem:[%s293] sm:$0xff] %v2637
        %2677 = vst [vmem:[%s293 + $0x8] sm:$0xff] %v2639
        %2678 = vst [vmem:[%s293 + $0x10] sm:$0xff] %v2642
        %2679 = vst [vmem:[%s293 + $0x18] sm:$0xff] %v2644
        %2680 = vst [vmem:[%s293 + $0x20] sm:$0xff] %v2647
        %2681 = vst [vmem:[%s293 + $0x28] sm:$0xff] %v2649
        %2682 = vst [vmem:[%s293 + $0x30] sm:$0xff] %v2652
        %2683 = vst [vmem:[%s293 + $0x38] sm:$0xff] %v2654
        %2684 = vst [vmem:[%s293 + $0x40] sm:$0xff] %v2657
        %2685 = vst [vmem:[%s293 + $0x48] sm:$0xff] %v2659
        %2686 = vst [vmem:[%s293 + $0x50] sm:$0xff] %v2662
        %2687 = vst [vmem:[%s293 + $0x58] sm:$0xff] %v2664
        %2688 = vst [vmem:[%s293 + $0x60] sm:$0xff] %v2667
        %2689 = vst [vmem:[%s293 + $0x68] sm:$0xff] %v2669
        %2690 = vst [vmem:[%s293 + $0x70] sm:$0xff] %v2672
        %2691 = vst [vmem:[%s293 + $0x78] sm:$0xff] %v2674
        %s2692 = sand.u32 %s166, 1
        %s2693 = scalar_lea.sflag [#allocation4], %s2692
        %s2694 = sand.u32 %s166, 1
        %s2695 = smul.addr %s2694, 128
        %s2696 = scalar_lea.vmem [#allocation7], %s2695
        // Predicated region
        $region53: #{tpu_custom_call.1} parent=43 // pred_check
          %p2697 = pneg %p176
        $region54: #{tpu_custom_call.1} parent=43 // pred_check_branch
          %2699 = sbr.rel (%p2697) target = $region56
        $region55: #{tpu_custom_call.1} parent=43 // pred_region
          %2701 = vsyncadd %s2693, 0
          %s2702 = smul.addr %s22, 16
          %s2703 = smul.addr %s2702, 8
          %s2704 = scalar_lea.hbm %s6, %s2703
          %s2705 = sshll.u32 %s2696, 4
          %s2706 = int_to_ptr.vmem [resolvable:$true] %s2705
          %s2707 = sshll.u32 %s2704, 4
          %s2708 = int_to_ptr.hbm [resolvable:$true] %s2707
          %2713 = dma.vmem_to_hbm [thread:$0]  %s2706, 2048, %s2708, %s2693, 128, 128, 8
        $region56: #{tpu_custom_call.1} parent=43 // pred_fallthru
          _
      $region44: #{tpu_custom_call.1} parent=5 // pred_fallthru
        _
      %p2714 = scmp.le.s32.totalorder 2, %s17
      // Predicated region
      $region57: #{tpu_custom_call.1} parent=5 // pred_check
        %p2715 = pneg %p2714
      $region58: #{tpu_custom_call.1} parent=5 // pred_check_branch
        %2717 = sbr.rel (%p2715) target = $region60
      $region59: #{tpu_custom_call.1} parent=5 // pred_region
        %s2718 = ssub.s32 %s17, 2
        // Predicated region
        $region61: #{tpu_custom_call.1} parent=59 // pred_check
          %p2719 = pneg %p182
        $region62: #{tpu_custom_call.1} parent=59 // pred_check_branch
          %2721 = sbr.rel (%p2719) target = $region64
        $region63: #{tpu_custom_call.1} parent=59 // pred_region
          %s2722 = sand.u32 %s167, 1
          %s2723 = scalar_lea.sflag [#allocation4], %s2722
          %s2724 = sand.u32 %s167, 1
          %s2725 = smul.addr %s2724, 128
          %s2726 = scalar_lea.vmem [#allocation7], %s2725
          %2728 = dma.done %s2723, 2048
        $region64: #{tpu_custom_call.1} parent=59 // pred_fallthru
          _
      $region60: #{tpu_custom_call.1} parent=5 // pred_fallthru
        _
    $region6: #{tpu_custom_call.1} parent=1 // loop_footer
      %s21 = sadd.s32 1, %s17
    $region7: #{tpu_custom_call.1} parent=1 // loop_footer_branch
      %16 = sbr.rel target = $region3
    $region8: #{tpu_custom_call.1} parent=1 // loop_exit
      _
    %2729 = vsyncpa [#allocation3], 1
    %s2730 = scalar_lea.sflag [#allocation3], 1
    %2731 = vsyncpa %s2730, 1
    %2732 = vsyncpa [#allocation6], 1
    %2733 = vsyncpa [#allocation4], 1
    %s2734 = scalar_lea.sflag [#allocation4], 1
    %2735 = vsyncpa %s2734, 1

</llo_original>
